<compile_context>
chip_gen: v7x
topology: tpu7x:2x2x1
jax: 0.10.0
libtpu: 0.0.40
codegen_flags: <defaults>
</compile_context>

<pallas_src>
import functools

import jax
import jax.numpy as jnp
from jax.experimental import pallas as pl
from jax.experimental.pallas import tpu as pltpu


def _round_up(n, m):
    return ((n + m - 1) // m) * m


def _attention_block_kernel(x_ref, vec_ref, wqkv_ref, wo_ref, w1_ref, w2_ref,
                            o_ref, attn_ref, *, num_heads):
    S, BB, E = x_ref.shape
    H = w1_ref.shape[1]
    hd = E // num_heads
    eps = 1e-5

    # Packed LayerNorm gains/biases and linear biases: one lane-dense (8, P) slab,
    # one DMA instead of nine tiny (1, E)-ish transfers.
    vec = vec_ref[...]
    ln1_w, ln1_b = vec[0, :E], vec[1, :E]
    bqkv = vec[2, :3 * E]
    bo = vec[3, :E]
    ln2_w, ln2_b = vec[4, :E], vec[5, :E]
    b1, b2 = vec[6, :H], vec[7, :E]

    def layer_norm(v, w, b):
        mu = jnp.mean(v, axis=-1, keepdims=True)
        var = jnp.mean(jnp.square(v - mu), axis=-1, keepdims=True)
        return (v - mu) * jax.lax.rsqrt(var + eps) * w + b

    # One in-VMEM relayout (S,BB,E)->(BB,S,E); HBM stays in [S,B,E] layout.
    xb = jnp.transpose(x_ref[...].astype(jnp.float32), (1, 0, 2))   # (BB, S, E)
    xt = xb.reshape(BB * S, E)                                      # token-major 2-D

    # ---- LN1 + fused QKV projection (single MXU matmul, contraction = E) ----
    xn = layer_norm(xt, ln1_w, ln1_b)
    qkv = jnp.dot(xn, wqkv_ref[...], preferred_element_type=jnp.float32) + bqkv

    scale = 1.0 / (hd ** 0.5)
    q = (qkv[:, 0 * E:1 * E] * scale).reshape(BB, S, E)   # scale applied once (hoisted)
    k = qkv[:, 1 * E:2 * E].reshape(BB, S, E)
    v = qkv[:, 2 * E:3 * E].reshape(BB, S, E)

    # ---- multi-head self-attention: batched over BB, per-head results written
    # ---- into a VMEM scratch slice (no concatenate, no explicit transposes) ----
    for h in range(num_heads):                            # static unroll, num_heads small
        sl = slice(h * hd, (h + 1) * hd)
        qh, kh, vh = q[:, :, sl], k[:, :, sl], v[:, :, sl]          # (BB, S, hd)
        s = jnp.einsum('bqd,bkd->bqk', qh, kh,
                       preferred_element_type=jnp.float32)          # contract last dims
        s = s - jnp.max(s, axis=-1, keepdims=True)
        p = jnp.exp(s)
        p = p * pl.reciprocal(jnp.sum(p, axis=-1, keepdims=True), approx=True)  # EUP slot
        attn_ref[:, :, sl] = jnp.einsum('bqk,bkd->bqd', p, vh,
                                        preferred_element_type=jnp.float32)

    attn = attn_ref[...].reshape(BB * S, E)

    # ---- output projection + residual 1 ----
    attn_out = jnp.dot(attn, wo_ref[...], preferred_element_type=jnp.float32) + bo
    x1 = xt + attn_out

    # ---- LN2 + FFN (Linear -> ReLU -> Linear) + residual 2 ----
    xn2 = layer_norm(x1, ln2_w, ln2_b)
    h1 = jnp.dot(xn2, w1_ref[...], preferred_element_type=jnp.float32) + b1
    h1 = jnp.maximum(h1, 0.0)
    ffn = jnp.dot(h1, w2_ref[...], preferred_element_type=jnp.float32) + b2
    out = (x1 + ffn).reshape(BB, S, E)

    # Relayout back to (S, BB, E) for the store (HBM output stays [S, B, E]).
    o_ref[...] = jnp.transpose(out, (1, 0, 2)).astype(o_ref.dtype)


def attention_block(x_sbe, params, num_heads):
    """x_sbe: [S, B, E] float32 (PyTorch seq-first convention). Returns [S, B, E]."""
    S, B, E = x_sbe.shape
    H = params["w1"].shape[1]
    assert E % num_heads == 0, "embed_dim must be divisible by num_heads"

    # Batch block: whole batch when small; otherwise chunks of 8 so the second-minor
    # block dim satisfies the (8,128) tiling rule and v7x's 2 TCs get >=2 grid steps.
    bb = B if (B <= 8 or B % 8 != 0) else 8
    grid = (B // bb,)

    # Pack the nine small parameter vectors into one lane-dense (8, P) slab.
    P = _round_up(max(3 * E, H), 128)
    pad = lambda v: jnp.pad(jnp.ravel(v).astype(jnp.float32), (0, P - v.size))
    vec = jnp.stack([
        pad(params["ln1_w"]), pad(params["ln1_b"]),
        pad(params["bqkv"]), pad(params["bo"]),
        pad(params["ln2_w"]), pad(params["ln2_b"]),
        pad(params["b1"]), pad(params["b2"]),
    ])

    # Matmul operands kept in f32 to preserve numerical parity with the f32 PyTorch
    # module (bf16 casting would be a further 2x MXU/DMA win if tolerance allows).
    kernel = functools.partial(_attention_block_kernel, num_heads=num_heads)
    full = lambda shape: pl.BlockSpec(shape, lambda b: (0, 0))

    return pl.pallas_call(
        kernel,
        out_shape=jax.ShapeDtypeStruct((S, B, E), x_sbe.dtype),
        grid_spec=pltpu.PrefetchScalarGridSpec(
            num_scalar_prefetch=0,
            grid=grid,
            in_specs=[
                pl.BlockSpec((S, bb, E), lambda b: (0, b, 0)),   # x, indexed via BlockSpec
                full((8, P)),                                    # packed LN / bias vectors
                full((E, 3 * E)),                                # qkv weight
                full((E, E)),                                    # out_proj weight
                full((E, H)),                                    # ffn w1
                full((H, E)),                                    # ffn w2
            ],
            out_specs=pl.BlockSpec((S, bb, E), lambda b: (0, b, 0)),
            scratch_shapes=[pltpu.VMEM((bb, S, E), jnp.float32)],
        ),
        compiler_params=pltpu.CompilerParams(
            dimension_semantics=("parallel",)),
    )(x_sbe, vec, params["wqkv"], params["wo"], params["w1"], params["w2"])


def reference_attention_block(x_sbe, params, num_heads):
    """Pure-JAX reference mirroring the PyTorch module (dropout=0)."""
    def ln(v, w, b, eps=1e-5):
        mu = jnp.mean(v, axis=-1, keepdims=True)
        var = jnp.mean((v - mu) ** 2, axis=-1, keepdims=True)
        return (v - mu) * jax.lax.rsqrt(var + eps) * w + b

    S, B, E = x_sbe.shape
    hd = E // num_heads
    xn = ln(x_sbe, params["ln1_w"], params["ln1_b"])
    qkv = xn @ params["wqkv"] + params["bqkv"]
    q, k, v = qkv[..., :E], qkv[..., E:2 * E], qkv[..., 2 * E:]

    def split_heads(t):  # (S, B, E) -> (B, nh, S, hd)
        return jnp.transpose(t.reshape(S, B, num_heads, hd), (1, 2, 0, 3))

    qh, kh, vh = split_heads(q), split_heads(k), split_heads(v)
    scores = jnp.einsum("bhqd,bhkd->bhqk", qh * (1.0 / hd ** 0.5), kh)
    p = jax.nn.softmax(scores, axis=-1)
    ctx = jnp.einsum("bhqk,bhkd->bhqd", p, vh)
    ctx = jnp.transpose(ctx, (2, 0, 1, 3)).reshape(S, B, E)
    attn_out = ctx @ params["wo"] + params["bo"]
    x1 = x_sbe + attn_out
    xn2 = ln(x1, params["ln2_w"], params["ln2_b"])
    h1 = jnp.maximum(xn2 @ params["w1"] + params["b1"], 0.0)
    ffn = h1 @ params["w2"] + params["b2"]
    return x1 + ffn


def init_params(key, embed_dim, hidden_dim):
    E, H = embed_dim, hidden_dim
    keys = jax.random.split(key, 8)
    s = 0.02
    return {
        "ln1_w": jnp.ones((E,), jnp.float32),
        "ln1_b": jnp.zeros((E,), jnp.float32),
        "wqkv": s * jax.random.normal(keys[0], (E, 3 * E), jnp.float32),
        "bqkv": s * jax.random.normal(keys[1], (3 * E,), jnp.float32),
        "wo":   s * jax.random.normal(keys[2], (E, E), jnp.float32),
        "bo":   s * jax.random.normal(keys[3], (E,), jnp.float32),
        "ln2_w": jnp.ones((E,), jnp.float32),
        "ln2_b": jnp.zeros((E,), jnp.float32),
        "w1":   s * jax.random.normal(keys[4], (E, H), jnp.float32),
        "b1":   s * jax.random.normal(keys[5], (H,), jnp.float32),
        "w2":   s * jax.random.normal(keys[6], (H, E), jnp.float32),
        "b2":   s * jax.random.normal(keys[7], (E,), jnp.float32),
    }


if __name__ == "__main__":
    S, B, E, H, NH = 8, 2, 32, 64, 4   # num patches, batch, embed_dim, hidden_dim, heads
    key = jax.random.PRNGKey(0)
    kx, kp = jax.random.split(key)
    x = jax.random.normal(kx, (S, B, E), jnp.float32)   # [Num Patches, Batch, embed_dim]
    params = init_params(kp, E, H)

    out = attention_block(x, params, NH)
    out = jax.block_until_ready(out)

    ref = reference_attention_block(x, params, NH)
    assert out.shape == (S, B, E)
    max_err = float(jnp.max(jnp.abs(out - ref)))
    assert jnp.allclose(out, ref, atol=5e-4, rtol=5e-4), \
        f"mismatch vs JAX reference (max abs err {max_err})"

    print("KERNEL_OK")
</pallas_src>

<mosaic_0001>
module attributes {stable_mosaic.version = 11 : i64} {
  func.func @_attention_block_kernel(%arg0: i32, %arg1: memref<8x2x32xf32, #tpu.memory_space<vmem>>, %arg2: memref<8x128xf32, #tpu.memory_space<vmem>>, %arg3: memref<32x96xf32, #tpu.memory_space<vmem>>, %arg4: memref<32x32xf32, #tpu.memory_space<vmem>>, %arg5: memref<32x64xf32, #tpu.memory_space<vmem>>, %arg6: memref<64x32xf32, #tpu.memory_space<vmem>>, %arg7: memref<8x2x32xf32, #tpu.memory_space<vmem>>, %arg8: memref<2x8x32xf32, #tpu.memory_space<vmem>>) attributes {dimension_semantics = [#tpu.dimension_semantics<parallel>], iteration_bounds = array<i64: 1>, scalar_prefetch = 0 : i64, scratch_operands = 1 : i64, tpu.core_type = #tpu.core_type<tc>, window_params = [{transform_indices = @transform_0, window_bounds = array<i64: 8, 2, 32>}, {pipeline_mode = #tpu.pipeline_mode<synchronous>, transform_indices = @transform_1, window_bounds = array<i64: 8, 128>}, {pipeline_mode = #tpu.pipeline_mode<synchronous>, transform_indices = @transform_2, window_bounds = array<i64: 32, 96>}, {pipeline_mode = #tpu.pipeline_mode<synchronous>, transform_indices = @transform_3, window_bounds = array<i64: 32, 32>}, {pipeline_mode = #tpu.pipeline_mode<synchronous>, transform_indices = @transform_4, window_bounds = array<i64: 32, 64>}, {pipeline_mode = #tpu.pipeline_mode<synchronous>, transform_indices = @transform_5, window_bounds = array<i64: 64, 32>}, {transform_indices = @transform_6, window_bounds = array<i64: 8, 2, 32>}]} {
    %c0 = arith.constant 0 : index
    %c0_0 = arith.constant 0 : index
    %0 = vector.load %arg2[%c0, %c0_0] : memref<8x128xf32, #tpu.memory_space<vmem>>, vector<8x128xf32>
    %1 = vector.extract_strided_slice %0 {offsets = [0, 0], sizes = [1, 32], strides = [1, 1]} : vector<8x128xf32> to vector<1x32xf32>
    %2 = vector.shape_cast %1 : vector<1x32xf32> to vector<32xf32>
    %3 = vector.extract_strided_slice %0 {offsets = [1, 0], sizes = [1, 32], strides = [1, 1]} : vector<8x128xf32> to vector<1x32xf32>
    %4 = vector.shape_cast %3 : vector<1x32xf32> to vector<32xf32>
    %5 = vector.extract_strided_slice %0 {offsets = [2, 0], sizes = [1, 96], strides = [1, 1]} : vector<8x128xf32> to vector<1x96xf32>
    %6 = vector.shape_cast %5 : vector<1x96xf32> to vector<96xf32>
    %7 = vector.extract_strided_slice %0 {offsets = [3, 0], sizes = [1, 32], strides = [1, 1]} : vector<8x128xf32> to vector<1x32xf32>
    %8 = vector.shape_cast %7 : vector<1x32xf32> to vector<32xf32>
    %9 = vector.extract_strided_slice %0 {offsets = [4, 0], sizes = [1, 32], strides = [1, 1]} : vector<8x128xf32> to vector<1x32xf32>
    %10 = vector.shape_cast %9 : vector<1x32xf32> to vector<32xf32>
    %11 = vector.extract_strided_slice %0 {offsets = [5, 0], sizes = [1, 32], strides = [1, 1]} : vector<8x128xf32> to vector<1x32xf32>
    %12 = vector.shape_cast %11 : vector<1x32xf32> to vector<32xf32>
    %13 = vector.extract_strided_slice %0 {offsets = [6, 0], sizes = [1, 64], strides = [1, 1]} : vector<8x128xf32> to vector<1x64xf32>
    %14 = vector.shape_cast %13 : vector<1x64xf32> to vector<64xf32>
    %15 = vector.extract_strided_slice %0 {offsets = [7, 0], sizes = [1, 32], strides = [1, 1]} : vector<8x128xf32> to vector<1x32xf32>
    %16 = vector.shape_cast %15 : vector<1x32xf32> to vector<32xf32>
    %c0_1 = arith.constant 0 : index
    %c0_2 = arith.constant 0 : index
    %c0_3 = arith.constant 0 : index
    %17 = vector.load %arg1[%c0_1, %c0_2, %c0_3] : memref<8x2x32xf32, #tpu.memory_space<vmem>>, vector<8x2x32xf32>
    %18 = tpu.transpose %17, [1, 0, 2] : vector<8x2x32xf32> -> vector<2x8x32xf32>
    %19 = vector.shape_cast %18 : vector<2x8x32xf32> to vector<16x32xf32>
    %cst = arith.constant dense<0.000000e+00> : vector<16xf32>
    %20 = vector.multi_reduction <add>, %19, %cst [1] : vector<16x32xf32> to vector<16xf32>
    %21 = vector.shape_cast %20 : vector<16xf32> to vector<16x1xf32>
    %cst_4 = arith.constant 3.200000e+01 : f32
    %22 = vector.broadcast %cst_4 : f32 to vector<16x1xf32>
    %23 = arith.divf %21, %22 : vector<16x1xf32>
    %24 = vector.broadcast %23 : vector<16x1xf32> to vector<16x32xf32>
    %25 = arith.subf %19, %24 : vector<16x32xf32>
    %26 = arith.mulf %25, %25 : vector<16x32xf32>
    %cst_5 = arith.constant dense<0.000000e+00> : vector<16xf32>
    %27 = vector.multi_reduction <add>, %26, %cst_5 [1] : vector<16x32xf32> to vector<16xf32>
    %28 = vector.shape_cast %27 : vector<16xf32> to vector<16x1xf32>
    %cst_6 = arith.constant 3.200000e+01 : f32
    %29 = vector.broadcast %cst_6 : f32 to vector<16x1xf32>
    %30 = arith.divf %28, %29 : vector<16x1xf32>
    %31 = vector.broadcast %23 : vector<16x1xf32> to vector<16x32xf32>
    %32 = arith.subf %19, %31 : vector<16x32xf32>
    %cst_7 = arith.constant 9.99999974E-6 : f32
    %33 = vector.broadcast %cst_7 : f32 to vector<16x1xf32>
    %34 = arith.addf %30, %33 : vector<16x1xf32>
    %35 = math.rsqrt %34 : vector<16x1xf32>
    %36 = vector.broadcast %35 : vector<16x1xf32> to vector<16x32xf32>
    %37 = arith.mulf %32, %36 : vector<16x32xf32>
    %38 = vector.shape_cast %2 : vector<32xf32> to vector<1x32xf32>
    %39 = vector.broadcast %38 : vector<1x32xf32> to vector<16x32xf32>
    %40 = arith.mulf %37, %39 : vector<16x32xf32>
    %41 = vector.shape_cast %4 : vector<32xf32> to vector<1x32xf32>
    %42 = vector.broadcast %41 : vector<1x32xf32> to vector<16x32xf32>
    %43 = arith.addf %40, %42 : vector<16x32xf32>
    %c0_8 = arith.constant 0 : index
    %c0_9 = arith.constant 0 : index
    %44 = vector.load %arg3[%c0_8, %c0_9] : memref<32x96xf32, #tpu.memory_space<vmem>>, vector<32x96xf32>
    %cst_10 = arith.constant dense<0.000000e+00> : vector<16x96xf32>
    %45 = tpu.matmul %43, %44, %cst_10 {dimension_numbers = #tpu.dot_dimension_numbers<[1], [0], [0], [1], [0, 0, 1, 1], [], []>} : vector<16x32xf32>, vector<32x96xf32>, vector<16x96xf32> -> vector<16x96xf32>
    %46 = vector.shape_cast %6 : vector<96xf32> to vector<1x96xf32>
    %47 = vector.broadcast %46 : vector<1x96xf32> to vector<16x96xf32>
    %48 = arith.addf %45, %47 : vector<16x96xf32>
    %49 = vector.extract_strided_slice %48 {offsets = [0, 0], sizes = [16, 32], strides = [1, 1]} : vector<16x96xf32> to vector<16x32xf32>
    %cst_11 = arith.constant 0.353553385 : f32
    %50 = vector.broadcast %cst_11 : f32 to vector<16x32xf32>
    %51 = arith.mulf %49, %50 : vector<16x32xf32>
    %52 = vector.shape_cast %51 : vector<16x32xf32> to vector<2x8x32xf32>
    %53 = vector.extract_strided_slice %48 {offsets = [0, 32], sizes = [16, 32], strides = [1, 1]} : vector<16x96xf32> to vector<16x32xf32>
    %54 = vector.shape_cast %53 : vector<16x32xf32> to vector<2x8x32xf32>
    %55 = vector.extract_strided_slice %48 {offsets = [0, 64], sizes = [16, 32], strides = [1, 1]} : vector<16x96xf32> to vector<16x32xf32>
    %56 = vector.shape_cast %55 : vector<16x32xf32> to vector<2x8x32xf32>
    %57 = vector.extract_strided_slice %52 {offsets = [0, 0, 0], sizes = [2, 8, 8], strides = [1, 1, 1]} : vector<2x8x32xf32> to vector<2x8x8xf32>
    %58 = vector.extract_strided_slice %54 {offsets = [0, 0, 0], sizes = [2, 8, 8], strides = [1, 1, 1]} : vector<2x8x32xf32> to vector<2x8x8xf32>
    %59 = vector.extract_strided_slice %56 {offsets = [0, 0, 0], sizes = [2, 8, 8], strides = [1, 1, 1]} : vector<2x8x32xf32> to vector<2x8x8xf32>
    "tpu.trace_start"() <{level = 10 : i32, message = "bqd,bkd->bqk"}> : () -> ()
    %cst_12 = arith.constant dense<0.000000e+00> : vector<2x8x8xf32>
    %60 = tpu.matmul %57, %58, %cst_12 {dimension_numbers = #tpu.dot_dimension_numbers<[2], [2], [1], [1], [0, 0, 0, 1, 1, 1], [0], [0]>} : vector<2x8x8xf32>, vector<2x8x8xf32>, vector<2x8x8xf32> -> vector<2x8x8xf32>
    "tpu.trace_stop"() : () -> ()
    %cst_13 = arith.constant dense<0xFF800000> : vector<2x8xf32>
    %61 = vector.multi_reduction <maximumf>, %60, %cst_13 [2] : vector<2x8x8xf32> to vector<2x8xf32>
    %62 = vector.shape_cast %61 : vector<2x8xf32> to vector<2x8x1xf32>
    %63 = vector.broadcast %62 : vector<2x8x1xf32> to vector<2x8x8xf32>
    %64 = arith.subf %60, %63 : vector<2x8x8xf32>
    %65 = math.exp %64 : vector<2x8x8xf32>
    %cst_14 = arith.constant dense<0.000000e+00> : vector<2x8xf32>
    %66 = vector.multi_reduction <add>, %65, %cst_14 [2] : vector<2x8x8xf32> to vector<2x8xf32>
    %67 = vector.shape_cast %66 : vector<2x8xf32> to vector<2x8x1xf32>
    %68 = tpu.reciprocal %67 {approx = true} : vector<2x8x1xf32> -> vector<2x8x1xf32>
    %69 = vector.broadcast %68 : vector<2x8x1xf32> to vector<2x8x8xf32>
    %70 = arith.mulf %65, %69 : vector<2x8x8xf32>
    "tpu.trace_start"() <{level = 10 : i32, message = "bqk,bkd->bqd"}> : () -> ()
    %cst_15 = arith.constant dense<0.000000e+00> : vector<2x8x8xf32>
    %71 = tpu.matmul %70, %59, %cst_15 {dimension_numbers = #tpu.dot_dimension_numbers<[2], [1], [1], [2], [0, 0, 0, 1, 1, 2], [0], [0]>} : vector<2x8x8xf32>, vector<2x8x8xf32>, vector<2x8x8xf32> -> vector<2x8x8xf32>
    "tpu.trace_stop"() : () -> ()
    %c0_16 = arith.constant 0 : index
    %c0_17 = arith.constant 0 : index
    %c0_18 = arith.constant 0 : index
    %72 = vector.load %arg8[%c0_16, %c0_17, %c0_18] : memref<2x8x32xf32, #tpu.memory_space<vmem>>, vector<2x8x8xf32>
    tpu.vector_store %arg8[%c0_16, %c0_17, %c0_18], %71 {strides = array<i32>} : memref<2x8x32xf32, #tpu.memory_space<vmem>>, vector<2x8x8xf32>,
    %73 = vector.extract_strided_slice %52 {offsets = [0, 0, 8], sizes = [2, 8, 8], strides = [1, 1, 1]} : vector<2x8x32xf32> to vector<2x8x8xf32>
    %74 = vector.extract_strided_slice %54 {offsets = [0, 0, 8], sizes = [2, 8, 8], strides = [1, 1, 1]} : vector<2x8x32xf32> to vector<2x8x8xf32>
    %75 = vector.extract_strided_slice %56 {offsets = [0, 0, 8], sizes = [2, 8, 8], strides = [1, 1, 1]} : vector<2x8x32xf32> to vector<2x8x8xf32>
    "tpu.trace_start"() <{level = 10 : i32, message = "bqd,bkd->bqk"}> : () -> ()
    %cst_19 = arith.constant dense<0.000000e+00> : vector<2x8x8xf32>
    %76 = tpu.matmul %73, %74, %cst_19 {dimension_numbers = #tpu.dot_dimension_numbers<[2], [2], [1], [1], [0, 0, 0, 1, 1, 1], [0], [0]>} : vector<2x8x8xf32>, vector<2x8x8xf32>, vector<2x8x8xf32> -> vector<2x8x8xf32>
    "tpu.trace_stop"() : () -> ()
    %cst_20 = arith.constant dense<0xFF800000> : vector<2x8xf32>
    %77 = vector.multi_reduction <maximumf>, %76, %cst_20 [2] : vector<2x8x8xf32> to vector<2x8xf32>
    %78 = vector.shape_cast %77 : vector<2x8xf32> to vector<2x8x1xf32>
    %79 = vector.broadcast %78 : vector<2x8x1xf32> to vector<2x8x8xf32>
    %80 = arith.subf %76, %79 : vector<2x8x8xf32>
    %81 = math.exp %80 : vector<2x8x8xf32>
    %cst_21 = arith.constant dense<0.000000e+00> : vector<2x8xf32>
    %82 = vector.multi_reduction <add>, %81, %cst_21 [2] : vector<2x8x8xf32> to vector<2x8xf32>
    %83 = vector.shape_cast %82 : vector<2x8xf32> to vector<2x8x1xf32>
    %84 = tpu.reciprocal %83 {approx = true} : vector<2x8x1xf32> -> vector<2x8x1xf32>
    %85 = vector.broadcast %84 : vector<2x8x1xf32> to vector<2x8x8xf32>
    %86 = arith.mulf %81, %85 : vector<2x8x8xf32>
    "tpu.trace_start"() <{level = 10 : i32, message = "bqk,bkd->bqd"}> : () -> ()
    %cst_22 = arith.constant dense<0.000000e+00> : vector<2x8x8xf32>
    %87 = tpu.matmul %86, %75, %cst_22 {dimension_numbers = #tpu.dot_dimension_numbers<[2], [1], [1], [2], [0, 0, 0, 1, 1, 2], [0], [0]>} : vector<2x8x8xf32>, vector<2x8x8xf32>, vector<2x8x8xf32> -> vector<2x8x8xf32>
    "tpu.trace_stop"() : () -> ()
    %c0_23 = arith.constant 0 : index
    %c0_24 = arith.constant 0 : index
    %c8 = arith.constant 8 : index
    %88 = vector.load %arg8[%c0_23, %c0_24, %c8] : memref<2x8x32xf32, #tpu.memory_space<vmem>>, vector<2x8x8xf32>
    tpu.vector_store %arg8[%c0_23, %c0_24, %c8], %87 {strides = array<i32>} : memref<2x8x32xf32, #tpu.memory_space<vmem>>, vector<2x8x8xf32>,
    %89 = vector.extract_strided_slice %52 {offsets = [0, 0, 16], sizes = [2, 8, 8], strides = [1, 1, 1]} : vector<2x8x32xf32> to vector<2x8x8xf32>
    %90 = vector.extract_strided_slice %54 {offsets = [0, 0, 16], sizes = [2, 8, 8], strides = [1, 1, 1]} : vector<2x8x32xf32> to vector<2x8x8xf32>
    %91 = vector.extract_strided_slice %56 {offsets = [0, 0, 16], sizes = [2, 8, 8], strides = [1, 1, 1]} : vector<2x8x32xf32> to vector<2x8x8xf32>
    "tpu.trace_start"() <{level = 10 : i32, message = "bqd,bkd->bqk"}> : () -> ()
    %cst_25 = arith.constant dense<0.000000e+00> : vector<2x8x8xf32>
    %92 = tpu.matmul %89, %90, %cst_25 {dimension_numbers = #tpu.dot_dimension_numbers<[2], [2], [1], [1], [0, 0, 0, 1, 1, 1], [0], [0]>} : vector<2x8x8xf32>, vector<2x8x8xf32>, vector<2x8x8xf32> -> vector<2x8x8xf32>
    "tpu.trace_stop"() : () -> ()
    %cst_26 = arith.constant dense<0xFF800000> : vector<2x8xf32>
    %93 = vector.multi_reduction <maximumf>, %92, %cst_26 [2] : vector<2x8x8xf32> to vector<2x8xf32>
    %94 = vector.shape_cast %93 : vector<2x8xf32> to vector<2x8x1xf32>
    %95 = vector.broadcast %94 : vector<2x8x1xf32> to vector<2x8x8xf32>
    %96 = arith.subf %92, %95 : vector<2x8x8xf32>
    %97 = math.exp %96 : vector<2x8x8xf32>
    %cst_27 = arith.constant dense<0.000000e+00> : vector<2x8xf32>
    %98 = vector.multi_reduction <add>, %97, %cst_27 [2] : vector<2x8x8xf32> to vector<2x8xf32>
    %99 = vector.shape_cast %98 : vector<2x8xf32> to vector<2x8x1xf32>
    %100 = tpu.reciprocal %99 {approx = true} : vector<2x8x1xf32> -> vector<2x8x1xf32>
    %101 = vector.broadcast %100 : vector<2x8x1xf32> to vector<2x8x8xf32>
    %102 = arith.mulf %97, %101 : vector<2x8x8xf32>
    "tpu.trace_start"() <{level = 10 : i32, message = "bqk,bkd->bqd"}> : () -> ()
    %cst_28 = arith.constant dense<0.000000e+00> : vector<2x8x8xf32>
    %103 = tpu.matmul %102, %91, %cst_28 {dimension_numbers = #tpu.dot_dimension_numbers<[2], [1], [1], [2], [0, 0, 0, 1, 1, 2], [0], [0]>} : vector<2x8x8xf32>, vector<2x8x8xf32>, vector<2x8x8xf32> -> vector<2x8x8xf32>
    "tpu.trace_stop"() : () -> ()
    %c0_29 = arith.constant 0 : index
    %c0_30 = arith.constant 0 : index
    %c16 = arith.constant 16 : index
    %104 = vector.load %arg8[%c0_29, %c0_30, %c16] : memref<2x8x32xf32, #tpu.memory_space<vmem>>, vector<2x8x8xf32>
    tpu.vector_store %arg8[%c0_29, %c0_30, %c16], %103 {strides = array<i32>} : memref<2x8x32xf32, #tpu.memory_space<vmem>>, vector<2x8x8xf32>,
    %105 = vector.extract_strided_slice %52 {offsets = [0, 0, 24], sizes = [2, 8, 8], strides = [1, 1, 1]} : vector<2x8x32xf32> to vector<2x8x8xf32>
    %106 = vector.extract_strided_slice %54 {offsets = [0, 0, 24], sizes = [2, 8, 8], strides = [1, 1, 1]} : vector<2x8x32xf32> to vector<2x8x8xf32>
    %107 = vector.extract_strided_slice %56 {offsets = [0, 0, 24], sizes = [2, 8, 8], strides = [1, 1, 1]} : vector<2x8x32xf32> to vector<2x8x8xf32>
    "tpu.trace_start"() <{level = 10 : i32, message = "bqd,bkd->bqk"}> : () -> ()
    %cst_31 = arith.constant dense<0.000000e+00> : vector<2x8x8xf32>
    %108 = tpu.matmul %105, %106, %cst_31 {dimension_numbers = #tpu.dot_dimension_numbers<[2], [2], [1], [1], [0, 0, 0, 1, 1, 1], [0], [0]>} : vector<2x8x8xf32>, vector<2x8x8xf32>, vector<2x8x8xf32> -> vector<2x8x8xf32>
    "tpu.trace_stop"() : () -> ()
    %cst_32 = arith.constant dense<0xFF800000> : vector<2x8xf32>
    %109 = vector.multi_reduction <maximumf>, %108, %cst_32 [2] : vector<2x8x8xf32> to vector<2x8xf32>
    %110 = vector.shape_cast %109 : vector<2x8xf32> to vector<2x8x1xf32>
    %111 = vector.broadcast %110 : vector<2x8x1xf32> to vector<2x8x8xf32>
    %112 = arith.subf %108, %111 : vector<2x8x8xf32>
    %113 = math.exp %112 : vector<2x8x8xf32>
    %cst_33 = arith.constant dense<0.000000e+00> : vector<2x8xf32>
    %114 = vector.multi_reduction <add>, %113, %cst_33 [2] : vector<2x8x8xf32> to vector<2x8xf32>
    %115 = vector.shape_cast %114 : vector<2x8xf32> to vector<2x8x1xf32>
    %116 = tpu.reciprocal %115 {approx = true} : vector<2x8x1xf32> -> vector<2x8x1xf32>
    %117 = vector.broadcast %116 : vector<2x8x1xf32> to vector<2x8x8xf32>
    %118 = arith.mulf %113, %117 : vector<2x8x8xf32>
    "tpu.trace_start"() <{level = 10 : i32, message = "bqk,bkd->bqd"}> : () -> ()
    %cst_34 = arith.constant dense<0.000000e+00> : vector<2x8x8xf32>
    %119 = tpu.matmul %118, %107, %cst_34 {dimension_numbers = #tpu.dot_dimension_numbers<[2], [1], [1], [2], [0, 0, 0, 1, 1, 2], [0], [0]>} : vector<2x8x8xf32>, vector<2x8x8xf32>, vector<2x8x8xf32> -> vector<2x8x8xf32>
    "tpu.trace_stop"() : () -> ()
    %c0_35 = arith.constant 0 : index
    %c0_36 = arith.constant 0 : index
    %c24 = arith.constant 24 : index
    %120 = vector.load %arg8[%c0_35, %c0_36, %c24] : memref<2x8x32xf32, #tpu.memory_space<vmem>>, vector<2x8x8xf32>
    tpu.vector_store %arg8[%c0_35, %c0_36, %c24], %119 {strides = array<i32>} : memref<2x8x32xf32, #tpu.memory_space<vmem>>, vector<2x8x8xf32>,
    %c0_37 = arith.constant 0 : index
    %c0_38 = arith.constant 0 : index
    %c0_39 = arith.constant 0 : index
    %121 = vector.load %arg8[%c0_37, %c0_38, %c0_39] : memref<2x8x32xf32, #tpu.memory_space<vmem>>, vector<2x8x32xf32>
    %122 = vector.shape_cast %121 : vector<2x8x32xf32> to vector<16x32xf32>
    %c0_40 = arith.constant 0 : index
    %c0_41 = arith.constant 0 : index
    %123 = vector.load %arg4[%c0_40, %c0_41] : memref<32x32xf32, #tpu.memory_space<vmem>>, vector<32x32xf32>
    %cst_42 = arith.constant dense<0.000000e+00> : vector<16x32xf32>
    %124 = tpu.matmul %122, %123, %cst_42 {dimension_numbers = #tpu.dot_dimension_numbers<[1], [0], [0], [1], [0, 0, 1, 1], [], []>} : vector<16x32xf32>, vector<32x32xf32>, vector<16x32xf32> -> vector<16x32xf32>
    %125 = vector.shape_cast %8 : vector<32xf32> to vector<1x32xf32>
    %126 = vector.broadcast %125 : vector<1x32xf32> to vector<16x32xf32>
    %127 = arith.addf %124, %126 : vector<16x32xf32>
    %128 = arith.addf %19, %127 : vector<16x32xf32>
    %cst_43 = arith.constant dense<0.000000e+00> : vector<16xf32>
    %129 = vector.multi_reduction <add>, %128, %cst_43 [1] : vector<16x32xf32> to vector<16xf32>
    %130 = vector.shape_cast %129 : vector<16xf32> to vector<16x1xf32>
    %cst_44 = arith.constant 3.200000e+01 : f32
    %131 = vector.broadcast %cst_44 : f32 to vector<16x1xf32>
    %132 = arith.divf %130, %131 : vector<16x1xf32>
    %133 = vector.broadcast %132 : vector<16x1xf32> to vector<16x32xf32>
    %134 = arith.subf %128, %133 : vector<16x32xf32>
    %135 = arith.mulf %134, %134 : vector<16x32xf32>
    %cst_45 = arith.constant dense<0.000000e+00> : vector<16xf32>
    %136 = vector.multi_reduction <add>, %135, %cst_45 [1] : vector<16x32xf32> to vector<16xf32>
    %137 = vector.shape_cast %136 : vector<16xf32> to vector<16x1xf32>
    %cst_46 = arith.constant 3.200000e+01 : f32
    %138 = vector.broadcast %cst_46 : f32 to vector<16x1xf32>
    %139 = arith.divf %137, %138 : vector<16x1xf32>
    %140 = vector.broadcast %132 : vector<16x1xf32> to vector<16x32xf32>
    %141 = arith.subf %128, %140 : vector<16x32xf32>
    %cst_47 = arith.constant 9.99999974E-6 : f32
    %142 = vector.broadcast %cst_47 : f32 to vector<16x1xf32>
    %143 = arith.addf %139, %142 : vector<16x1xf32>
    %144 = math.rsqrt %143 : vector<16x1xf32>
    %145 = vector.broadcast %144 : vector<16x1xf32> to vector<16x32xf32>
    %146 = arith.mulf %141, %145 : vector<16x32xf32>
    %147 = vector.shape_cast %10 : vector<32xf32> to vector<1x32xf32>
    %148 = vector.broadcast %147 : vector<1x32xf32> to vector<16x32xf32>
    %149 = arith.mulf %146, %148 : vector<16x32xf32>
    %150 = vector.shape_cast %12 : vector<32xf32> to vector<1x32xf32>
    %151 = vector.broadcast %150 : vector<1x32xf32> to vector<16x32xf32>
    %152 = arith.addf %149, %151 : vector<16x32xf32>
    %c0_48 = arith.constant 0 : index
    %c0_49 = arith.constant 0 : index
    %153 = vector.load %arg5[%c0_48, %c0_49] : memref<32x64xf32, #tpu.memory_space<vmem>>, vector<32x64xf32>
    %cst_50 = arith.constant dense<0.000000e+00> : vector<16x64xf32>
    %154 = tpu.matmul %152, %153, %cst_50 {dimension_numbers = #tpu.dot_dimension_numbers<[1], [0], [0], [1], [0, 0, 1, 1], [], []>} : vector<16x32xf32>, vector<32x64xf32>, vector<16x64xf32> -> vector<16x64xf32>
    %155 = vector.shape_cast %14 : vector<64xf32> to vector<1x64xf32>
    %156 = vector.broadcast %155 : vector<1x64xf32> to vector<16x64xf32>
    %157 = arith.addf %154, %156 : vector<16x64xf32>
    %cst_51 = arith.constant 0.000000e+00 : f32
    %158 = vector.broadcast %cst_51 : f32 to vector<16x64xf32>
    %159 = arith.maximumf %157, %158 : vector<16x64xf32>
    %c0_52 = arith.constant 0 : index
    %c0_53 = arith.constant 0 : index
    %160 = vector.load %arg6[%c0_52, %c0_53] : memref<64x32xf32, #tpu.memory_space<vmem>>, vector<64x32xf32>
    %cst_54 = arith.constant dense<0.000000e+00> : vector<16x32xf32>
    %161 = tpu.matmul %159, %160, %cst_54 {dimension_numbers = #tpu.dot_dimension_numbers<[1], [0], [0], [1], [0, 0, 1, 1], [], []>} : vector<16x64xf32>, vector<64x32xf32>, vector<16x32xf32> -> vector<16x32xf32>
    %162 = vector.shape_cast %16 : vector<32xf32> to vector<1x32xf32>
    %163 = vector.broadcast %162 : vector<1x32xf32> to vector<16x32xf32>
    %164 = arith.addf %161, %163 : vector<16x32xf32>
    %165 = arith.addf %128, %164 : vector<16x32xf32>
    %166 = vector.shape_cast %165 : vector<16x32xf32> to vector<2x8x32xf32>
    %167 = tpu.transpose %166, [1, 0, 2] : vector<2x8x32xf32> -> vector<8x2x32xf32>
    %c0_55 = arith.constant 0 : index
    %c0_56 = arith.constant 0 : index
    %c0_57 = arith.constant 0 : index
    %168 = vector.load %arg7[%c0_55, %c0_56, %c0_57] : memref<8x2x32xf32, #tpu.memory_space<vmem>>, vector<8x2x32xf32>
    tpu.vector_store %arg7[%c0_55, %c0_56, %c0_57], %167 {strides = array<i32>} : memref<8x2x32xf32, #tpu.memory_space<vmem>>, vector<8x2x32xf32>,
    return
  }
  func.func @transform_0(%arg0: i32) -> (i32, i32, i32) {
    %c0_i32 = arith.constant 0 : i32
    %c0_i32_0 = arith.constant 0 : i32
    %c0_i32_1 = arith.constant 0 : i32
    return %c0_i32, %arg0, %c0_i32_0 : i32, i32, i32
  }
  func.func @transform_1(%arg0: i32) -> (i32, i32) {
    %c0_i32 = arith.constant 0 : i32
    %c0_i32_0 = arith.constant 0 : i32
    %c0_i32_1 = arith.constant 0 : i32
    return %c0_i32, %c0_i32_0 : i32, i32
  }
  func.func @transform_2(%arg0: i32) -> (i32, i32) {
    %c0_i32 = arith.constant 0 : i32
    %c0_i32_0 = arith.constant 0 : i32
    %c0_i32_1 = arith.constant 0 : i32
    return %c0_i32, %c0_i32_0 : i32, i32
  }
  func.func @transform_3(%arg0: i32) -> (i32, i32) {
    %c0_i32 = arith.constant 0 : i32
    %c0_i32_0 = arith.constant 0 : i32
    %c0_i32_1 = arith.constant 0 : i32
    return %c0_i32, %c0_i32_0 : i32, i32
  }
  func.func @transform_4(%arg0: i32) -> (i32, i32) {
    %c0_i32 = arith.constant 0 : i32
    %c0_i32_0 = arith.constant 0 : i32
    %c0_i32_1 = arith.constant 0 : i32
    return %c0_i32, %c0_i32_0 : i32, i32
  }
  func.func @transform_5(%arg0: i32) -> (i32, i32) {
    %c0_i32 = arith.constant 0 : i32
    %c0_i32_0 = arith.constant 0 : i32
    %c0_i32_1 = arith.constant 0 : i32
    return %c0_i32, %c0_i32_0 : i32, i32
  }
  func.func @transform_6(%arg0: i32) -> (i32, i32, i32) {
    %c0_i32 = arith.constant 0 : i32
    %c0_i32_0 = arith.constant 0 : i32
    %c0_i32_1 = arith.constant 0 : i32
    return %c0_i32, %arg0, %c0_i32_0 : i32, i32, i32
  }
}

</mosaic_0001>

<llo_original>
// kernel: tpu_custom_call.1
$region0: #{tpu_custom_call.1}
  #allocation0 [shape = 'u32[]', space=smem, size = 0x4, offset = 0x4, fixed_abs, tag = 'smem constant byte address 0x4 - core index']
  #allocation1 [shape = 'u32[144,128]{1,0:T(1,128)}', space=vmem, size = 0x12000, scoped, tag = 'internal scratch']
  #allocation2 [shape = 'f32[2,8,32]{2,1,0:T(8,128)}', space=vmem, size = 0x2000, scoped, tag = 'scratch operand']
  %s0 = inlined_call_operand.hbm [shape: f32[8,2,32], index: 0, kind: input, shape index: {}]
  %s1 = inlined_call_operand.hbm [shape: f32[8,128], index: 1, kind: input, shape index: {}]
  %s2 = inlined_call_operand.vmem [shape: f32[32,96], index: 2, kind: input, shape index: {}]
  %s3 = inlined_call_operand.vmem [shape: f32[32,32], index: 3, kind: input, shape index: {}]
  %s4 = inlined_call_operand.vmem [shape: f32[32,64], index: 4, kind: input, shape index: {}]
  %s5 = inlined_call_operand.vmem [shape: f32[64,32], index: 5, kind: input, shape index: {}]
  %s6 = inlined_call_operand.hbm [shape: f32[8,2,32], index: 6, kind: output, shape index: {}]
  %s7 = sld [smem:[#allocation0]]
  $region42: #{tpu_custom_call.1} parent=0
    _
  %s9 = ssub.s32 1, %s7
  %s10 = scalar_select 0, %s9, %s7
  $region1: #{tpu_custom_call.1} parent=0
    #allocation3 [shape = 'u8[8192]{0}', space=vmem, size = 0x2000, scoped, tag = 'input window, operand 0, single buffered']
    #allocation4 [shape = 's32[1]{0}', space=sflag, size = 0x4, scoped, tag = 'scoped memory for tpu_custom_call.1']
    #allocation5 [shape = 's32[1]{0}', space=sflag, size = 0x4, scoped, tag = 'scoped memory for tpu_custom_call.1']
    #allocation6 [shape = 'u8[4096]{0}', space=vmem, size = 0x1000, scoped, tag = 'input window, operand 1, single buffered']
    #allocation7 [shape = 's32[1]{0}', space=sflag, size = 0x4, scoped, tag = 'scoped memory for tpu_custom_call.1']
    #allocation8 [shape = 'u8[8192]{0}', space=vmem, size = 0x2000, scoped, tag = 'output window, operand 0, single buffered']
    %11 = vsyncpa [#allocation4], 0
    %12 = vsyncpa [#allocation7], 0
    %13 = vsyncpa [#allocation5], 0
    // Predicated region
    $region2: #{tpu_custom_call.1} parent=1 // pred_check
      _
    $region3: #{tpu_custom_call.1} parent=1 // pred_check_branch
      %15 = sbr.rel (0) target = $region5
    $region4: #{tpu_custom_call.1} parent=1 // pred_region
      %s17 = ssub.s32 256, 256
      %18 = vsyncadd [#allocation4], %s17
      %s19 = sshll.u32 [#allocation3], 4
      %s20 = int_to_ptr.vmem [resolvable:$true] %s19
      %25 = dma.hbm_to_vmem [thread:$0]  %s0, 256, %s20, [#allocation4], 32, 32, 2
    $region5: #{tpu_custom_call.1} parent=1 // pred_fallthru
      _
    // Predicated region
    $region6: #{tpu_custom_call.1} parent=1 // pred_check
      _
    $region7: #{tpu_custom_call.1} parent=1 // pred_check_branch
      %27 = sbr.rel (0) target = $region9
    $region8: #{tpu_custom_call.1} parent=1 // pred_region
      %s29 = ssub.s32 128, 128
      %30 = vsyncadd [#allocation7], %s29
      %s32 = sshll.u32 [#allocation6], 4
      %s33 = int_to_ptr.vmem [resolvable:$true] %s32
      %35 = dma.hbm_to_vmem [thread:$0]  %s1, 128, %s33, [#allocation7]
    $region9: #{tpu_custom_call.1} parent=1 // pred_fallthru
      _
    // Predicated region
    $region10: #{tpu_custom_call.1} parent=1 // pred_check
      _
    $region11: #{tpu_custom_call.1} parent=1 // pred_check_branch
      %37 = sbr.rel (0) target = $region13
    $region12: #{tpu_custom_call.1} parent=1 // pred_region
      _
    $region13: #{tpu_custom_call.1} parent=1 // pred_fallthru
      _
    // Predicated region
    $region14: #{tpu_custom_call.1} parent=1 // pred_check
      _
    $region15: #{tpu_custom_call.1} parent=1 // pred_check_branch
      %39 = sbr.rel (0) target = $region17
    $region16: #{tpu_custom_call.1} parent=1 // pred_region
      _
    $region17: #{tpu_custom_call.1} parent=1 // pred_fallthru
      _
    // Predicated region
    $region18: #{tpu_custom_call.1} parent=1 // pred_check
      _
    $region19: #{tpu_custom_call.1} parent=1 // pred_check_branch
      %41 = sbr.rel (0) target = $region21
    $region20: #{tpu_custom_call.1} parent=1 // pred_region
      _
    $region21: #{tpu_custom_call.1} parent=1 // pred_fallthru
      _
    // Predicated region
    $region22: #{tpu_custom_call.1} parent=1 // pred_check
      _
    $region23: #{tpu_custom_call.1} parent=1 // pred_check_branch
      %43 = sbr.rel (0) target = $region25
    $region24: #{tpu_custom_call.1} parent=1 // pred_region
      _
    $region25: #{tpu_custom_call.1} parent=1 // pred_fallthru
      _
    // Predicated region
    $region26: #{tpu_custom_call.1} parent=1 // pred_check
      _
    $region27: #{tpu_custom_call.1} parent=1 // pred_check_branch
      %45 = sbr.rel (0) target = $region29
    $region28: #{tpu_custom_call.1} parent=1 // pred_region
      %46 = dma.done [#allocation4], 256
    $region29: #{tpu_custom_call.1} parent=1 // pred_fallthru
      _
    // Predicated region
    $region30: #{tpu_custom_call.1} parent=1 // pred_check
      _
    $region31: #{tpu_custom_call.1} parent=1 // pred_check_branch
      %48 = sbr.rel (0) target = $region33
    $region32: #{tpu_custom_call.1} parent=1 // pred_region
      %49 = dma.done [#allocation7], 128
    $region33: #{tpu_custom_call.1} parent=1 // pred_fallthru
      _
    %v50 = vld [vmem:[#allocation6] sm:$0xff]
    %v51 = vld [vmem:[#allocation3] sm:$0x3]
    %v52 = vld [vmem:[#allocation3 + $0x2] sm:$0x3]
    %v53 = vld [vmem:[#allocation3 + $0x4] sm:$0x3]
    %v54 = vld [vmem:[#allocation3 + $0x6] sm:$0x3]
    %v55 = vld [vmem:[#allocation3 + $0x8] sm:$0x3]
    %v56 = vld [vmem:[#allocation3 + $0xa] sm:$0x3]
    %v57 = vld [vmem:[#allocation3 + $0xc] sm:$0x3]
    %v58 = vld [vmem:[#allocation3 + $0xe] sm:$0x3]
    %v59 = vcombine.low %v51, %v53
    %v61 = vunpack.c.l.s4 1983009808
    %v62 = vunpack.c.0.s8 %v61
    %v63 = vlaneseq
    %v64 = vshrl.u32 %v63, 7
    %v65 = vsub.s32 %v62, %v64
    %v66 = vrot.slane %v59, %v65
    %v67 = vcombine.low %v52, %v54
    %v69 = vunpack.c.l.s4 1983009808
    %v70 = vunpack.c.0.s8 %v69
    %v71 = vlaneseq
    %v72 = vshrl.u32 %v71, 7
    %v73 = vsub.s32 %v70, %v72
    %v74 = vrot.slane %v67, %v73
    %v75 = vcombine.low %v55, %v57
    %v77 = vunpack.c.l.s4 1983009808
    %v78 = vunpack.c.0.s8 %v77
    %v79 = vlaneseq
    %v80 = vshrl.u32 %v79, 7
    %v81 = vsub.s32 %v78, %v80
    %v82 = vrot.slane %v75, %v81
    %v83 = vcombine.low %v56, %v58
    %v85 = vunpack.c.l.s4 1983009808
    %v86 = vunpack.c.0.s8 %v85
    %v87 = vlaneseq
    %v88 = vshrl.u32 %v87, 7
    %v89 = vsub.s32 %v86, %v88
    %v90 = vrot.slane %v83, %v89
    %v91 = vcombine.low %v66, %v74
    %v93 = vunpack.c.l.s4 1934713408
    %v94 = vunpack.c.0.s8 %v93
    %v95 = vlaneseq
    %v96 = vshrl.u32 %v95, 7
    %v97 = vsub.s32 %v94, %v96
    %v98 = vrot.slane %v91, %v97
    %v99 = vcombine.low %v82, %v90
    %v101 = vunpack.c.l.s4 1934713408
    %v102 = vunpack.c.0.s8 %v101
    %v103 = vlaneseq
    %v104 = vshrl.u32 %v103, 7
    %v105 = vsub.s32 %v102, %v104
    %v106 = vrot.slane %v99, %v105
    %v107 = vcombine.low %v98, %v106
    %v108 = vcombine.high %v98, %v106
    %vm109 = vcmask 261120
    %v110 = vsel %vm109, %v107, 0.0
    %111 = vadd.xlane.f32.xlu0 %v110
    %v112 = vpop.xlane.xlu0 %111
    %v113 = vsel %vm109, %v108, 0.0
    %114 = vadd.xlane.f32.xlu0 %v113
    %v115 = vpop.xlane.xlu0 %114
    %v116 = vrcp.pop 32.0
    %v117 = vmul.f32 %v112, %v116
    %v118 = vmul.f32 %v115, %v116
    %v119 = vsub.f32 %v107, %v117
    %v120 = vsub.f32 %v108, %v118
    %v121 = vmul.f32 %v119, %v119
    %v122 = vmul.f32 %v120, %v120
    %v123 = vsel %vm109, %v121, 0.0
    %124 = vadd.xlane.f32.xlu0 %v123
    %v125 = vpop.xlane.xlu0 %124
    %v126 = vsel %vm109, %v122, 0.0
    %127 = vadd.xlane.f32.xlu0 %v126
    %v128 = vpop.xlane.xlu0 %127
    %v129 = vmul.f32 %v125, %v116
    %v130 = vmul.f32 %v128, %v116
    %v131 = vadd.f32 %v129, 1e-05
    %v132 = vadd.f32 %v130, 1e-05
    %v133 = vrsqrt.pop %v131
    %v134 = vrsqrt.pop %v132
    %v135 = vmul.f32 %v119, %v133
    %v136 = vmul.f32 %v120, %v134
    %v137 = vlaneseq
    %v138 = vshrl.u32 %v137, 7
    %v139 = vsub.s32 0, %v138
    %v140 = vrot.slane %v50, %v139
    %v141 = vmul.f32 %v135, %v140
    %v142 = vmul.f32 %v136, %v140
    %v143 = vlaneseq
    %v144 = vshrl.u32 %v143, 7
    %v145 = vsub.s32 1, %v144
    %v146 = vrot.slane %v50, %v145
    %v147 = vadd.f32 %v141, %v146
    %v148 = vadd.f32 %v142, %v146
    %v149 = vld [vmem:[%s2] sm:$0xff]
    %v150 = vld [vmem:[%s2 + $0x8] sm:$0xff]
    %v151 = vld [vmem:[%s2 + $0x10] sm:$0xff]
    %v152 = vld [vmem:[%s2 + $0x18] sm:$0xff]
    %v153 = vlaneseq
    %v154 = vshrl.u32 %v153, 7
    %v155 = vsub.s32 2, %v154
    %v156 = vrot.slane %v50, %v155
    %v158 = vsel %vm109, %v147, 0
    %v161 = vsel %vm109, %v148, 0
    %163 = vmatprep.subr.mxu0 0.0
    %164 = vmatpush1.msra.mxu0 %v149
    %165 = vmatprep.subr.mxu0 0.0
    %166 = vmatpush1.msra.mxu0 %v150
    %167 = vmatprep.subr.mxu0 0.0
    %168 = vmatpush1.msra.mxu0 %v151
    %169 = vmatprep.subr.mxu0 0.0
    %170 = vmatpush1.msra.mxu0 %v152
    %171 = vmatprep.subr.mxu0 0.0
    %172 = vmatpush1.msra.mxu0 0.0
    %173 = vmatprep.subr.mxu0 0.0
    %174 = vmatpush1.msra.mxu0 0.0
    %175 = vmatprep.subr.mxu0 0.0
    %176 = vmatpush1.msra.mxu0 0.0
    %177 = vmatprep.subr.mxu0 0.0
    %178 = vmatpush1.msra.mxu0 0.0
    %179 = vmatprep.subr.mxu0 0.0
    %180 = vmatpush1.msra.mxu0 0.0
    %181 = vmatprep.subr.mxu0 0.0
    %182 = vmatpush1.msra.mxu0 0.0
    %183 = vmatprep.subr.mxu0 0.0
    %184 = vmatpush1.msra.mxu0 0.0
    %185 = vmatprep.subr.mxu0 0.0
    %186 = vmatpush1.msra.mxu0 0.0
    %187 = vmatprep.subr.mxu0 0.0
    %188 = vmatpush1.msra.mxu0 0.0
    %189 = vmatprep.subr.mxu0 0.0
    %190 = vmatpush1.msra.mxu0 0.0
    %191 = vmatprep.subr.mxu0 0.0
    %192 = vmatpush1.msra.mxu0 0.0
    %193 = vmatprep.subr.mxu0 0.0
    %194 = vmatpush1.msra.mxu0 0.0
    %195 = vmatprep.subr.mxu0 0.0
    %196 = vmatpush1.msra.mxu0 0.0
    %197 = vmatprep.subr.mxu0 0.0
    %198 = vmatpush1.msra.mxu0 0.0
    %199 = vmatprep.subr.mxu0 0.0
    %200 = vmatpush1.msra.mxu0 0.0
    %201 = vmatprep.subr.mxu0 0.0
    %202 = vmatpush1.msra.mxu0 0.0
    %203 = vmatprep.subr.mxu0 0.0
    %204 = vmatpush1.msra.mxu0 0.0
    %205 = vmatprep.subr.mxu0 0.0
    %206 = vmatpush1.msra.mxu0 0.0
    %207 = vmatprep.subr.mxu0 0.0
    %208 = vmatpush1.msra.mxu0 0.0
    %209 = vmatprep.subr.mxu0 0.0
    %210 = vmatpush1.msra.mxu0 0.0
    %211 = vmatprep.subr.mxu0 0.0
    %212 = vmatpush1.msra.mxu0 0.0
    %213 = vmatprep.subr.mxu0 0.0
    %214 = vmatpush1.msra.mxu0 0.0
    %215 = vmatprep.subr.mxu0 0.0
    %216 = vmatpush1.msra.mxu0 0.0
    %217 = vmatprep.subr.mxu0 0.0
    %218 = vmatpush1.msra.mxu0 0.0
    %219 = vmatprep.subr.mxu0 0.0
    %220 = vmatpush1.msra.mxu0 0.0
    %221 = vmatprep.subr.mxu0 0.0
    %222 = vmatpush1.msra.mxu0 0.0
    %223 = vmatprep.subr.mxu0 0.0
    %224 = vmatpush1.msra.mxu0 0.0
    %225 = vmatprep.subr.mxu0 0.0
    %226 = vmatpush1.msra.mxu0 0.0
    %227 = vmatprep.mubr.f32.mxu0 0.0
    %228 = vmatmul.mubr.f32.gmra.mrb[0].mxu0 %v158
    %v229 = vpop.f32.mrb[0].mxu0
    %v230 = vadd.f32 %v156, %v229
    %v231 = vpop.f32.mrb[0].mxu0
    %232 = vmatprep.mubr.f32.mxu0 0.0
    %233 = vmatmul.mubr.f32.gmra.mrb[0].mxu0 %v161
    %v234 = vpop.f32.mrb[0].mxu0
    %v235 = vadd.f32 %v156, %v234
    %v236 = vpop.f32.mrb[0].mxu0
    %237 = vdwg.mxu0
    %v238 = vmul.f32 %v230, 0.35355338
    %v239 = vmul.f32 %v235, 0.35355338
    %241 = vrot.lane.b32.xlu0 %v230, 96
    %v242 = vpop.permute.xlu0 %241
    %vm243 = vcmask 64512
    %v245 = vsel %vm243, %v238, 0
    %v247 = vsel %vm243, %v242, 0
    %249 = vmatprep.subr.mxu0 0.0
    %250 = vmatpush1.xpose.msra.mxu0 %v247
    %251 = vmatprep.subr.mxu0 0.0
    %252 = vmatpush1.xpose.msra.mxu0 0.0
    %253 = vmatprep.subr.mxu0 0.0
    %254 = vmatpush1.xpose.msra.mxu0 0.0
    %255 = vmatprep.subr.mxu0 0.0
    %256 = vmatpush1.xpose.msra.mxu0 0.0
    %257 = vmatprep.subr.mxu0 0.0
    %258 = vmatpush1.xpose.msra.mxu0 0.0
    %259 = vmatprep.subr.mxu0 0.0
    %260 = vmatpush1.xpose.msra.mxu0 0.0
    %261 = vmatprep.subr.mxu0 0.0
    %262 = vmatpush1.xpose.msra.mxu0 0.0
    %263 = vmatprep.subr.mxu0 0.0
    %264 = vmatpush1.xpose.msra.mxu0 0.0
    %265 = vmatprep.subr.mxu0 0.0
    %266 = vmatpush1.xpose.msra.mxu0 0.0
    %267 = vmatprep.subr.mxu0 0.0
    %268 = vmatpush1.xpose.msra.mxu0 0.0
    %269 = vmatprep.subr.mxu0 0.0
    %270 = vmatpush1.xpose.msra.mxu0 0.0
    %271 = vmatprep.subr.mxu0 0.0
    %272 = vmatpush1.xpose.msra.mxu0 0.0
    %273 = vmatprep.subr.mxu0 0.0
    %274 = vmatpush1.xpose.msra.mxu0 0.0
    %275 = vmatprep.subr.mxu0 0.0
    %276 = vmatpush1.xpose.msra.mxu0 0.0
    %277 = vmatprep.subr.mxu0 0.0
    %278 = vmatpush1.xpose.msra.mxu0 0.0
    %279 = vmatprep.subr.mxu0 0.0
    %280 = vmatpush1.xpose.msra.mxu0 0.0
    %281 = vmatprep.subr.mxu0 0.0
    %282 = vmatpush1.xpose.msra.mxu0 0.0
    %283 = vmatprep.subr.mxu0 0.0
    %284 = vmatpush1.xpose.msra.mxu0 0.0
    %285 = vmatprep.subr.mxu0 0.0
    %286 = vmatpush1.xpose.msra.mxu0 0.0
    %287 = vmatprep.subr.mxu0 0.0
    %288 = vmatpush1.xpose.msra.mxu0 0.0
    %289 = vmatprep.subr.mxu0 0.0
    %290 = vmatpush1.xpose.msra.mxu0 0.0
    %291 = vmatprep.subr.mxu0 0.0
    %292 = vmatpush1.xpose.msra.mxu0 0.0
    %293 = vmatprep.subr.mxu0 0.0
    %294 = vmatpush1.xpose.msra.mxu0 0.0
    %295 = vmatprep.subr.mxu0 0.0
    %296 = vmatpush1.xpose.msra.mxu0 0.0
    %297 = vmatprep.subr.mxu0 0.0
    %298 = vmatpush1.xpose.msra.mxu0 0.0
    %299 = vmatprep.subr.mxu0 0.0
    %300 = vmatpush1.xpose.msra.mxu0 0.0
    %301 = vmatprep.subr.mxu0 0.0
    %302 = vmatpush1.xpose.msra.mxu0 0.0
    %303 = vmatprep.subr.mxu0 0.0
    %304 = vmatpush1.xpose.msra.mxu0 0.0
    %305 = vmatprep.subr.mxu0 0.0
    %306 = vmatpush1.xpose.msra.mxu0 0.0
    %307 = vmatprep.subr.mxu0 0.0
    %308 = vmatpush1.xpose.msra.mxu0 0.0
    %309 = vmatprep.subr.mxu0 0.0
    %310 = vmatpush1.xpose.msra.mxu0 0.0
    %311 = vmatprep.subr.mxu0 0.0
    %312 = vmatpush1.xpose.msra.mxu0 0.0
    %313 = vmatprep.mubr.f32.mxu0 0.0
    %314 = vmatmul.mubr.f32.gmra.mrb[0].mxu0 %v245
    %v315 = vpop.f32.mrb[0].mxu0
    %v316 = vadd.f32 0.0, %v315
    %v317 = vpop.f32.mrb[0].mxu0
    %318 = vdwg.mxu0
    %320 = vrot.lane.b32.xlu0 %v235, 96
    %v321 = vpop.permute.xlu0 %320
    %v323 = vsel %vm243, %v239, 0
    %v325 = vsel %vm243, %v321, 0
    %327 = vmatprep.subr.mxu0 0.0
    %328 = vmatpush1.xpose.msra.mxu0 %v325
    %329 = vmatprep.subr.mxu0 0.0
    %330 = vmatpush1.xpose.msra.mxu0 0.0
    %331 = vmatprep.subr.mxu0 0.0
    %332 = vmatpush1.xpose.msra.mxu0 0.0
    %333 = vmatprep.subr.mxu0 0.0
    %334 = vmatpush1.xpose.msra.mxu0 0.0
    %335 = vmatprep.subr.mxu0 0.0
    %336 = vmatpush1.xpose.msra.mxu0 0.0
    %337 = vmatprep.subr.mxu0 0.0
    %338 = vmatpush1.xpose.msra.mxu0 0.0
    %339 = vmatprep.subr.mxu0 0.0
    %340 = vmatpush1.xpose.msra.mxu0 0.0
    %341 = vmatprep.subr.mxu0 0.0
    %342 = vmatpush1.xpose.msra.mxu0 0.0
    %343 = vmatprep.subr.mxu0 0.0
    %344 = vmatpush1.xpose.msra.mxu0 0.0
    %345 = vmatprep.subr.mxu0 0.0
    %346 = vmatpush1.xpose.msra.mxu0 0.0
    %347 = vmatprep.subr.mxu0 0.0
    %348 = vmatpush1.xpose.msra.mxu0 0.0
    %349 = vmatprep.subr.mxu0 0.0
    %350 = vmatpush1.xpose.msra.mxu0 0.0
    %351 = vmatprep.subr.mxu0 0.0
    %352 = vmatpush1.xpose.msra.mxu0 0.0
    %353 = vmatprep.subr.mxu0 0.0
    %354 = vmatpush1.xpose.msra.mxu0 0.0
    %355 = vmatprep.subr.mxu0 0.0
    %356 = vmatpush1.xpose.msra.mxu0 0.0
    %357 = vmatprep.subr.mxu0 0.0
    %358 = vmatpush1.xpose.msra.mxu0 0.0
    %359 = vmatprep.subr.mxu0 0.0
    %360 = vmatpush1.xpose.msra.mxu0 0.0
    %361 = vmatprep.subr.mxu0 0.0
    %362 = vmatpush1.xpose.msra.mxu0 0.0
    %363 = vmatprep.subr.mxu0 0.0
    %364 = vmatpush1.xpose.msra.mxu0 0.0
    %365 = vmatprep.subr.mxu0 0.0
    %366 = vmatpush1.xpose.msra.mxu0 0.0
    %367 = vmatprep.subr.mxu0 0.0
    %368 = vmatpush1.xpose.msra.mxu0 0.0
    %369 = vmatprep.subr.mxu0 0.0
    %370 = vmatpush1.xpose.msra.mxu0 0.0
    %371 = vmatprep.subr.mxu0 0.0
    %372 = vmatpush1.xpose.msra.mxu0 0.0
    %373 = vmatprep.subr.mxu0 0.0
    %374 = vmatpush1.xpose.msra.mxu0 0.0
    %375 = vmatprep.subr.mxu0 0.0
    %376 = vmatpush1.xpose.msra.mxu0 0.0
    %377 = vmatprep.subr.mxu0 0.0
    %378 = vmatpush1.xpose.msra.mxu0 0.0
    %379 = vmatprep.subr.mxu0 0.0
    %380 = vmatpush1.xpose.msra.mxu0 0.0
    %381 = vmatprep.subr.mxu0 0.0
    %382 = vmatpush1.xpose.msra.mxu0 0.0
    %383 = vmatprep.subr.mxu0 0.0
    %384 = vmatpush1.xpose.msra.mxu0 0.0
    %385 = vmatprep.subr.mxu0 0.0
    %386 = vmatpush1.xpose.msra.mxu0 0.0
    %387 = vmatprep.subr.mxu0 0.0
    %388 = vmatpush1.xpose.msra.mxu0 0.0
    %389 = vmatprep.subr.mxu0 0.0
    %390 = vmatpush1.xpose.msra.mxu0 0.0
    %391 = vmatprep.mubr.f32.mxu0 0.0
    %392 = vmatmul.mubr.f32.gmra.mrb[0].mxu0 %v323
    %v393 = vpop.f32.mrb[0].mxu0
    %v394 = vadd.f32 0.0, %v393
    %v395 = vpop.f32.mrb[0].mxu0
    %396 = vdwg.mxu0
    %v397 = vsel %vm243, %v316, -inf
    %398 = vmax.xlane.f32.xlu0 %v397
    %v399 = vpop.xlane.xlu0 %398
    %v400 = vsel %vm243, %v394, -inf
    %401 = vmax.xlane.f32.xlu0 %v400
    %v402 = vpop.xlane.xlu0 %401
    %v403 = vsub.f32 %v316, %v399
    %v404 = vsub.f32 %v394, %v402
    %v405 = vmul.f32 %v403, 1.442695
    %v406 = vpow.pop %v405
    %v407 = vmul.f32 %v404, 1.442695
    %v408 = vpow.pop %v407
    %v409 = vsel %vm243, %v406, 0.0
    %410 = vadd.xlane.f32.xlu0 %v409
    %v411 = vpop.xlane.xlu0 %410
    %v412 = vsel %vm243, %v408, 0.0
    %413 = vadd.xlane.f32.xlu0 %v412
    %v414 = vpop.xlane.xlu0 %413
    %v415 = vrcp.pop %v411
    %v416 = vrcp.pop %v414
    %v417 = vmul.f32 %v406, %v415
    %v418 = vmul.f32 %v408, %v416
    %419 = vrot.lane.b32.xlu0 %v230, 64
    %v420 = vpop.permute.xlu0 %419
    %v423 = vsel %vm243, %v417, 0
    %425 = vmatprep.subr.mxu0 0.0
    %426 = vmatpush1.msra.mxu0 %v420
    %427 = vmatprep.subr.mxu0 0.0
    %428 = vmatpush1.msra.mxu0 0.0
    %429 = vmatprep.subr.mxu0 0.0
    %430 = vmatpush1.msra.mxu0 0.0
    %431 = vmatprep.subr.mxu0 0.0
    %432 = vmatpush1.msra.mxu0 0.0
    %433 = vmatprep.subr.mxu0 0.0
    %434 = vmatpush1.msra.mxu0 0.0
    %435 = vmatprep.subr.mxu0 0.0
    %436 = vmatpush1.msra.mxu0 0.0
    %437 = vmatprep.subr.mxu0 0.0
    %438 = vmatpush1.msra.mxu0 0.0
    %439 = vmatprep.subr.mxu0 0.0
    %440 = vmatpush1.msra.mxu0 0.0
    %441 = vmatprep.subr.mxu0 0.0
    %442 = vmatpush1.msra.mxu0 0.0
    %443 = vmatprep.subr.mxu0 0.0
    %444 = vmatpush1.msra.mxu0 0.0
    %445 = vmatprep.subr.mxu0 0.0
    %446 = vmatpush1.msra.mxu0 0.0
    %447 = vmatprep.subr.mxu0 0.0
    %448 = vmatpush1.msra.mxu0 0.0
    %449 = vmatprep.subr.mxu0 0.0
    %450 = vmatpush1.msra.mxu0 0.0
    %451 = vmatprep.subr.mxu0 0.0
    %452 = vmatpush1.msra.mxu0 0.0
    %453 = vmatprep.subr.mxu0 0.0
    %454 = vmatpush1.msra.mxu0 0.0
    %455 = vmatprep.subr.mxu0 0.0
    %456 = vmatpush1.msra.mxu0 0.0
    %457 = vmatprep.subr.mxu0 0.0
    %458 = vmatpush1.msra.mxu0 0.0
    %459 = vmatprep.subr.mxu0 0.0
    %460 = vmatpush1.msra.mxu0 0.0
    %461 = vmatprep.subr.mxu0 0.0
    %462 = vmatpush1.msra.mxu0 0.0
    %463 = vmatprep.subr.mxu0 0.0
    %464 = vmatpush1.msra.mxu0 0.0
    %465 = vmatprep.subr.mxu0 0.0
    %466 = vmatpush1.msra.mxu0 0.0
    %467 = vmatprep.subr.mxu0 0.0
    %468 = vmatpush1.msra.mxu0 0.0
    %469 = vmatprep.subr.mxu0 0.0
    %470 = vmatpush1.msra.mxu0 0.0
    %471 = vmatprep.subr.mxu0 0.0
    %472 = vmatpush1.msra.mxu0 0.0
    %473 = vmatprep.subr.mxu0 0.0
    %474 = vmatpush1.msra.mxu0 0.0
    %475 = vmatprep.subr.mxu0 0.0
    %476 = vmatpush1.msra.mxu0 0.0
    %477 = vmatprep.subr.mxu0 0.0
    %478 = vmatpush1.msra.mxu0 0.0
    %479 = vmatprep.subr.mxu0 0.0
    %480 = vmatpush1.msra.mxu0 0.0
    %481 = vmatprep.subr.mxu0 0.0
    %482 = vmatpush1.msra.mxu0 0.0
    %483 = vmatprep.subr.mxu0 0.0
    %484 = vmatpush1.msra.mxu0 0.0
    %485 = vmatprep.subr.mxu0 0.0
    %486 = vmatpush1.msra.mxu0 0.0
    %487 = vmatprep.subr.mxu0 0.0
    %488 = vmatpush1.msra.mxu0 0.0
    %489 = vmatprep.mubr.f32.mxu0 0.0
    %490 = vmatmul.mubr.f32.gmra.mrb[0].mxu0 %v423
    %v491 = vpop.f32.mrb[0].mxu0
    %v492 = vadd.f32 0.0, %v491
    %v493 = vpop.f32.mrb[0].mxu0
    %494 = vdwg.mxu0
    %495 = vrot.lane.b32.xlu0 %v235, 64
    %v496 = vpop.permute.xlu0 %495
    %v499 = vsel %vm243, %v418, 0
    %501 = vmatprep.subr.mxu0 0.0
    %502 = vmatpush1.msra.mxu0 %v496
    %503 = vmatprep.subr.mxu0 0.0
    %504 = vmatpush1.msra.mxu0 0.0
    %505 = vmatprep.subr.mxu0 0.0
    %506 = vmatpush1.msra.mxu0 0.0
    %507 = vmatprep.subr.mxu0 0.0
    %508 = vmatpush1.msra.mxu0 0.0
    %509 = vmatprep.subr.mxu0 0.0
    %510 = vmatpush1.msra.mxu0 0.0
    %511 = vmatprep.subr.mxu0 0.0
    %512 = vmatpush1.msra.mxu0 0.0
    %513 = vmatprep.subr.mxu0 0.0
    %514 = vmatpush1.msra.mxu0 0.0
    %515 = vmatprep.subr.mxu0 0.0
    %516 = vmatpush1.msra.mxu0 0.0
    %517 = vmatprep.subr.mxu0 0.0
    %518 = vmatpush1.msra.mxu0 0.0
    %519 = vmatprep.subr.mxu0 0.0
    %520 = vmatpush1.msra.mxu0 0.0
    %521 = vmatprep.subr.mxu0 0.0
    %522 = vmatpush1.msra.mxu0 0.0
    %523 = vmatprep.subr.mxu0 0.0
    %524 = vmatpush1.msra.mxu0 0.0
    %525 = vmatprep.subr.mxu0 0.0
    %526 = vmatpush1.msra.mxu0 0.0
    %527 = vmatprep.subr.mxu0 0.0
    %528 = vmatpush1.msra.mxu0 0.0
    %529 = vmatprep.subr.mxu0 0.0
    %530 = vmatpush1.msra.mxu0 0.0
    %531 = vmatprep.subr.mxu0 0.0
    %532 = vmatpush1.msra.mxu0 0.0
    %533 = vmatprep.subr.mxu0 0.0
    %534 = vmatpush1.msra.mxu0 0.0
    %535 = vmatprep.subr.mxu0 0.0
    %536 = vmatpush1.msra.mxu0 0.0
    %537 = vmatprep.subr.mxu0 0.0
    %538 = vmatpush1.msra.mxu0 0.0
    %539 = vmatprep.subr.mxu0 0.0
    %540 = vmatpush1.msra.mxu0 0.0
    %541 = vmatprep.subr.mxu0 0.0
    %542 = vmatpush1.msra.mxu0 0.0
    %543 = vmatprep.subr.mxu0 0.0
    %544 = vmatpush1.msra.mxu0 0.0
    %545 = vmatprep.subr.mxu0 0.0
    %546 = vmatpush1.msra.mxu0 0.0
    %547 = vmatprep.subr.mxu0 0.0
    %548 = vmatpush1.msra.mxu0 0.0
    %549 = vmatprep.subr.mxu0 0.0
    %550 = vmatpush1.msra.mxu0 0.0
    %551 = vmatprep.subr.mxu0 0.0
    %552 = vmatpush1.msra.mxu0 0.0
    %553 = vmatprep.subr.mxu0 0.0
    %554 = vmatpush1.msra.mxu0 0.0
    %555 = vmatprep.subr.mxu0 0.0
    %556 = vmatpush1.msra.mxu0 0.0
    %557 = vmatprep.subr.mxu0 0.0
    %558 = vmatpush1.msra.mxu0 0.0
    %559 = vmatprep.subr.mxu0 0.0
    %560 = vmatpush1.msra.mxu0 0.0
    %561 = vmatprep.subr.mxu0 0.0
    %562 = vmatpush1.msra.mxu0 0.0
    %563 = vmatprep.subr.mxu0 0.0
    %564 = vmatpush1.msra.mxu0 0.0
    %565 = vmatprep.mubr.f32.mxu0 0.0
    %566 = vmatmul.mubr.f32.gmra.mrb[0].mxu0 %v499
    %v567 = vpop.f32.mrb[0].mxu0
    %v568 = vadd.f32 0.0, %v567
    %v569 = vpop.f32.mrb[0].mxu0
    %570 = vdwg.mxu0
    %571 = vst.msk [vmem:[#allocation2] sm:$0xff] %vm243, %v492
    %572 = vst.msk [vmem:[#allocation2 + $0x8] sm:$0xff] %vm243, %v568
    %573 = vrot.lane.b32.xlu0 %v238, 120
    %v574 = vpop.permute.xlu0 %573
    %575 = vrot.lane.b32.xlu0 %v230, 88
    %v576 = vpop.permute.xlu0 %575
    %v577 = vsel %vm243, %v574, 0
    %v579 = vsel %vm243, %v576, 0
    %581 = vmatprep.subr.mxu0 0.0
    %582 = vmatpush1.xpose.msra.mxu0 %v579
    %583 = vmatprep.subr.mxu0 0.0
    %584 = vmatpush1.xpose.msra.mxu0 0.0
    %585 = vmatprep.subr.mxu0 0.0
    %586 = vmatpush1.xpose.msra.mxu0 0.0
    %587 = vmatprep.subr.mxu0 0.0
    %588 = vmatpush1.xpose.msra.mxu0 0.0
    %589 = vmatprep.subr.mxu0 0.0
    %590 = vmatpush1.xpose.msra.mxu0 0.0
    %591 = vmatprep.subr.mxu0 0.0
    %592 = vmatpush1.xpose.msra.mxu0 0.0
    %593 = vmatprep.subr.mxu0 0.0
    %594 = vmatpush1.xpose.msra.mxu0 0.0
    %595 = vmatprep.subr.mxu0 0.0
    %596 = vmatpush1.xpose.msra.mxu0 0.0
    %597 = vmatprep.subr.mxu0 0.0
    %598 = vmatpush1.xpose.msra.mxu0 0.0
    %599 = vmatprep.subr.mxu0 0.0
    %600 = vmatpush1.xpose.msra.mxu0 0.0
    %601 = vmatprep.subr.mxu0 0.0
    %602 = vmatpush1.xpose.msra.mxu0 0.0
    %603 = vmatprep.subr.mxu0 0.0
    %604 = vmatpush1.xpose.msra.mxu0 0.0
    %605 = vmatprep.subr.mxu0 0.0
    %606 = vmatpush1.xpose.msra.mxu0 0.0
    %607 = vmatprep.subr.mxu0 0.0
    %608 = vmatpush1.xpose.msra.mxu0 0.0
    %609 = vmatprep.subr.mxu0 0.0
    %610 = vmatpush1.xpose.msra.mxu0 0.0
    %611 = vmatprep.subr.mxu0 0.0
    %612 = vmatpush1.xpose.msra.mxu0 0.0
    %613 = vmatprep.subr.mxu0 0.0
    %614 = vmatpush1.xpose.msra.mxu0 0.0
    %615 = vmatprep.subr.mxu0 0.0
    %616 = vmatpush1.xpose.msra.mxu0 0.0
    %617 = vmatprep.subr.mxu0 0.0
    %618 = vmatpush1.xpose.msra.mxu0 0.0
    %619 = vmatprep.subr.mxu0 0.0
    %620 = vmatpush1.xpose.msra.mxu0 0.0
    %621 = vmatprep.subr.mxu0 0.0
    %622 = vmatpush1.xpose.msra.mxu0 0.0
    %623 = vmatprep.subr.mxu0 0.0
    %624 = vmatpush1.xpose.msra.mxu0 0.0
    %625 = vmatprep.subr.mxu0 0.0
    %626 = vmatpush1.xpose.msra.mxu0 0.0
    %627 = vmatprep.subr.mxu0 0.0
    %628 = vmatpush1.xpose.msra.mxu0 0.0
    %629 = vmatprep.subr.mxu0 0.0
    %630 = vmatpush1.xpose.msra.mxu0 0.0
    %631 = vmatprep.subr.mxu0 0.0
    %632 = vmatpush1.xpose.msra.mxu0 0.0
    %633 = vmatprep.subr.mxu0 0.0
    %634 = vmatpush1.xpose.msra.mxu0 0.0
    %635 = vmatprep.subr.mxu0 0.0
    %636 = vmatpush1.xpose.msra.mxu0 0.0
    %637 = vmatprep.subr.mxu0 0.0
    %638 = vmatpush1.xpose.msra.mxu0 0.0
    %639 = vmatprep.subr.mxu0 0.0
    %640 = vmatpush1.xpose.msra.mxu0 0.0
    %641 = vmatprep.subr.mxu0 0.0
    %642 = vmatpush1.xpose.msra.mxu0 0.0
    %643 = vmatprep.subr.mxu0 0.0
    %644 = vmatpush1.xpose.msra.mxu0 0.0
    %645 = vmatprep.mubr.f32.mxu0 0.0
    %646 = vmatmul.mubr.f32.gmra.mrb[0].mxu0 %v577
    %v647 = vpop.f32.mrb[0].mxu0
    %v648 = vadd.f32 0.0, %v647
    %v649 = vpop.f32.mrb[0].mxu0
    %650 = vdwg.mxu0
    %651 = vrot.lane.b32.xlu0 %v239, 120
    %v652 = vpop.permute.xlu0 %651
    %653 = vrot.lane.b32.xlu0 %v235, 88
    %v654 = vpop.permute.xlu0 %653
    %v655 = vsel %vm243, %v652, 0
    %v657 = vsel %vm243, %v654, 0
    %659 = vmatprep.subr.mxu0 0.0
    %660 = vmatpush1.xpose.msra.mxu0 %v657
    %661 = vmatprep.subr.mxu0 0.0
    %662 = vmatpush1.xpose.msra.mxu0 0.0
    %663 = vmatprep.subr.mxu0 0.0
    %664 = vmatpush1.xpose.msra.mxu0 0.0
    %665 = vmatprep.subr.mxu0 0.0
    %666 = vmatpush1.xpose.msra.mxu0 0.0
    %667 = vmatprep.subr.mxu0 0.0
    %668 = vmatpush1.xpose.msra.mxu0 0.0
    %669 = vmatprep.subr.mxu0 0.0
    %670 = vmatpush1.xpose.msra.mxu0 0.0
    %671 = vmatprep.subr.mxu0 0.0
    %672 = vmatpush1.xpose.msra.mxu0 0.0
    %673 = vmatprep.subr.mxu0 0.0
    %674 = vmatpush1.xpose.msra.mxu0 0.0
    %675 = vmatprep.subr.mxu0 0.0
    %676 = vmatpush1.xpose.msra.mxu0 0.0
    %677 = vmatprep.subr.mxu0 0.0
    %678 = vmatpush1.xpose.msra.mxu0 0.0
    %679 = vmatprep.subr.mxu0 0.0
    %680 = vmatpush1.xpose.msra.mxu0 0.0
    %681 = vmatprep.subr.mxu0 0.0
    %682 = vmatpush1.xpose.msra.mxu0 0.0
    %683 = vmatprep.subr.mxu0 0.0
    %684 = vmatpush1.xpose.msra.mxu0 0.0
    %685 = vmatprep.subr.mxu0 0.0
    %686 = vmatpush1.xpose.msra.mxu0 0.0
    %687 = vmatprep.subr.mxu0 0.0
    %688 = vmatpush1.xpose.msra.mxu0 0.0
    %689 = vmatprep.subr.mxu0 0.0
    %690 = vmatpush1.xpose.msra.mxu0 0.0
    %691 = vmatprep.subr.mxu0 0.0
    %692 = vmatpush1.xpose.msra.mxu0 0.0
    %693 = vmatprep.subr.mxu0 0.0
    %694 = vmatpush1.xpose.msra.mxu0 0.0
    %695 = vmatprep.subr.mxu0 0.0
    %696 = vmatpush1.xpose.msra.mxu0 0.0
    %697 = vmatprep.subr.mxu0 0.0
    %698 = vmatpush1.xpose.msra.mxu0 0.0
    %699 = vmatprep.subr.mxu0 0.0
    %700 = vmatpush1.xpose.msra.mxu0 0.0
    %701 = vmatprep.subr.mxu0 0.0
    %702 = vmatpush1.xpose.msra.mxu0 0.0
    %703 = vmatprep.subr.mxu0 0.0
    %704 = vmatpush1.xpose.msra.mxu0 0.0
    %705 = vmatprep.subr.mxu0 0.0
    %706 = vmatpush1.xpose.msra.mxu0 0.0
    %707 = vmatprep.subr.mxu0 0.0
    %708 = vmatpush1.xpose.msra.mxu0 0.0
    %709 = vmatprep.subr.mxu0 0.0
    %710 = vmatpush1.xpose.msra.mxu0 0.0
    %711 = vmatprep.subr.mxu0 0.0
    %712 = vmatpush1.xpose.msra.mxu0 0.0
    %713 = vmatprep.subr.mxu0 0.0
    %714 = vmatpush1.xpose.msra.mxu0 0.0
    %715 = vmatprep.subr.mxu0 0.0
    %716 = vmatpush1.xpose.msra.mxu0 0.0
    %717 = vmatprep.subr.mxu0 0.0
    %718 = vmatpush1.xpose.msra.mxu0 0.0
    %719 = vmatprep.subr.mxu0 0.0
    %720 = vmatpush1.xpose.msra.mxu0 0.0
    %721 = vmatprep.subr.mxu0 0.0
    %722 = vmatpush1.xpose.msra.mxu0 0.0
    %723 = vmatprep.mubr.f32.mxu0 0.0
    %724 = vmatmul.mubr.f32.gmra.mrb[0].mxu0 %v655
    %v725 = vpop.f32.mrb[0].mxu0
    %v726 = vadd.f32 0.0, %v725
    %v727 = vpop.f32.mrb[0].mxu0
    %728 = vdwg.mxu0
    %v729 = vsel %vm243, %v648, -inf
    %730 = vmax.xlane.f32.xlu0 %v729
    %v731 = vpop.xlane.xlu0 %730
    %v732 = vsel %vm243, %v726, -inf
    %733 = vmax.xlane.f32.xlu0 %v732
    %v734 = vpop.xlane.xlu0 %733
    %v735 = vsub.f32 %v648, %v731
    %v736 = vsub.f32 %v726, %v734
    %v737 = vmul.f32 %v735, 1.442695
    %v738 = vpow.pop %v737
    %v739 = vmul.f32 %v736, 1.442695
    %v740 = vpow.pop %v739
    %v741 = vsel %vm243, %v738, 0.0
    %742 = vadd.xlane.f32.xlu0 %v741
    %v743 = vpop.xlane.xlu0 %742
    %v744 = vsel %vm243, %v740, 0.0
    %745 = vadd.xlane.f32.xlu0 %v744
    %v746 = vpop.xlane.xlu0 %745
    %v747 = vrcp.pop %v743
    %v748 = vrcp.pop %v746
    %v749 = vmul.f32 %v738, %v747
    %v750 = vmul.f32 %v740, %v748
    %751 = vrot.lane.b32.xlu0 %v230, 56
    %v752 = vpop.permute.xlu0 %751
    %v755 = vsel %vm243, %v749, 0
    %757 = vmatprep.subr.mxu0 0.0
    %758 = vmatpush1.msra.mxu0 %v752
    %759 = vmatprep.subr.mxu0 0.0
    %760 = vmatpush1.msra.mxu0 0.0
    %761 = vmatprep.subr.mxu0 0.0
    %762 = vmatpush1.msra.mxu0 0.0
    %763 = vmatprep.subr.mxu0 0.0
    %764 = vmatpush1.msra.mxu0 0.0
    %765 = vmatprep.subr.mxu0 0.0
    %766 = vmatpush1.msra.mxu0 0.0
    %767 = vmatprep.subr.mxu0 0.0
    %768 = vmatpush1.msra.mxu0 0.0
    %769 = vmatprep.subr.mxu0 0.0
    %770 = vmatpush1.msra.mxu0 0.0
    %771 = vmatprep.subr.mxu0 0.0
    %772 = vmatpush1.msra.mxu0 0.0
    %773 = vmatprep.subr.mxu0 0.0
    %774 = vmatpush1.msra.mxu0 0.0
    %775 = vmatprep.subr.mxu0 0.0
    %776 = vmatpush1.msra.mxu0 0.0
    %777 = vmatprep.subr.mxu0 0.0
    %778 = vmatpush1.msra.mxu0 0.0
    %779 = vmatprep.subr.mxu0 0.0
    %780 = vmatpush1.msra.mxu0 0.0
    %781 = vmatprep.subr.mxu0 0.0
    %782 = vmatpush1.msra.mxu0 0.0
    %783 = vmatprep.subr.mxu0 0.0
    %784 = vmatpush1.msra.mxu0 0.0
    %785 = vmatprep.subr.mxu0 0.0
    %786 = vmatpush1.msra.mxu0 0.0
    %787 = vmatprep.subr.mxu0 0.0
    %788 = vmatpush1.msra.mxu0 0.0
    %789 = vmatprep.subr.mxu0 0.0
    %790 = vmatpush1.msra.mxu0 0.0
    %791 = vmatprep.subr.mxu0 0.0
    %792 = vmatpush1.msra.mxu0 0.0
    %793 = vmatprep.subr.mxu0 0.0
    %794 = vmatpush1.msra.mxu0 0.0
    %795 = vmatprep.subr.mxu0 0.0
    %796 = vmatpush1.msra.mxu0 0.0
    %797 = vmatprep.subr.mxu0 0.0
    %798 = vmatpush1.msra.mxu0 0.0
    %799 = vmatprep.subr.mxu0 0.0
    %800 = vmatpush1.msra.mxu0 0.0
    %801 = vmatprep.subr.mxu0 0.0
    %802 = vmatpush1.msra.mxu0 0.0
    %803 = vmatprep.subr.mxu0 0.0
    %804 = vmatpush1.msra.mxu0 0.0
    %805 = vmatprep.subr.mxu0 0.0
    %806 = vmatpush1.msra.mxu0 0.0
    %807 = vmatprep.subr.mxu0 0.0
    %808 = vmatpush1.msra.mxu0 0.0
    %809 = vmatprep.subr.mxu0 0.0
    %810 = vmatpush1.msra.mxu0 0.0
    %811 = vmatprep.subr.mxu0 0.0
    %812 = vmatpush1.msra.mxu0 0.0
    %813 = vmatprep.subr.mxu0 0.0
    %814 = vmatpush1.msra.mxu0 0.0
    %815 = vmatprep.subr.mxu0 0.0
    %816 = vmatpush1.msra.mxu0 0.0
    %817 = vmatprep.subr.mxu0 0.0
    %818 = vmatpush1.msra.mxu0 0.0
    %819 = vmatprep.subr.mxu0 0.0
    %820 = vmatpush1.msra.mxu0 0.0
    %821 = vmatprep.mubr.f32.mxu0 0.0
    %822 = vmatmul.mubr.f32.gmra.mrb[0].mxu0 %v755
    %v823 = vpop.f32.mrb[0].mxu0
    %v824 = vadd.f32 0.0, %v823
    %v825 = vpop.f32.mrb[0].mxu0
    %826 = vdwg.mxu0
    %827 = vrot.lane.b32.xlu0 %v235, 56
    %v828 = vpop.permute.xlu0 %827
    %v831 = vsel %vm243, %v750, 0
    %833 = vmatprep.subr.mxu0 0.0
    %834 = vmatpush1.msra.mxu0 %v828
    %835 = vmatprep.subr.mxu0 0.0
    %836 = vmatpush1.msra.mxu0 0.0
    %837 = vmatprep.subr.mxu0 0.0
    %838 = vmatpush1.msra.mxu0 0.0
    %839 = vmatprep.subr.mxu0 0.0
    %840 = vmatpush1.msra.mxu0 0.0
    %841 = vmatprep.subr.mxu0 0.0
    %842 = vmatpush1.msra.mxu0 0.0
    %843 = vmatprep.subr.mxu0 0.0
    %844 = vmatpush1.msra.mxu0 0.0
    %845 = vmatprep.subr.mxu0 0.0
    %846 = vmatpush1.msra.mxu0 0.0
    %847 = vmatprep.subr.mxu0 0.0
    %848 = vmatpush1.msra.mxu0 0.0
    %849 = vmatprep.subr.mxu0 0.0
    %850 = vmatpush1.msra.mxu0 0.0
    %851 = vmatprep.subr.mxu0 0.0
    %852 = vmatpush1.msra.mxu0 0.0
    %853 = vmatprep.subr.mxu0 0.0
    %854 = vmatpush1.msra.mxu0 0.0
    %855 = vmatprep.subr.mxu0 0.0
    %856 = vmatpush1.msra.mxu0 0.0
    %857 = vmatprep.subr.mxu0 0.0
    %858 = vmatpush1.msra.mxu0 0.0
    %859 = vmatprep.subr.mxu0 0.0
    %860 = vmatpush1.msra.mxu0 0.0
    %861 = vmatprep.subr.mxu0 0.0
    %862 = vmatpush1.msra.mxu0 0.0
    %863 = vmatprep.subr.mxu0 0.0
    %864 = vmatpush1.msra.mxu0 0.0
    %865 = vmatprep.subr.mxu0 0.0
    %866 = vmatpush1.msra.mxu0 0.0
    %867 = vmatprep.subr.mxu0 0.0
    %868 = vmatpush1.msra.mxu0 0.0
    %869 = vmatprep.subr.mxu0 0.0
    %870 = vmatpush1.msra.mxu0 0.0
    %871 = vmatprep.subr.mxu0 0.0
    %872 = vmatpush1.msra.mxu0 0.0
    %873 = vmatprep.subr.mxu0 0.0
    %874 = vmatpush1.msra.mxu0 0.0
    %875 = vmatprep.subr.mxu0 0.0
    %876 = vmatpush1.msra.mxu0 0.0
    %877 = vmatprep.subr.mxu0 0.0
    %878 = vmatpush1.msra.mxu0 0.0
    %879 = vmatprep.subr.mxu0 0.0
    %880 = vmatpush1.msra.mxu0 0.0
    %881 = vmatprep.subr.mxu0 0.0
    %882 = vmatpush1.msra.mxu0 0.0
    %883 = vmatprep.subr.mxu0 0.0
    %884 = vmatpush1.msra.mxu0 0.0
    %885 = vmatprep.subr.mxu0 0.0
    %886 = vmatpush1.msra.mxu0 0.0
    %887 = vmatprep.subr.mxu0 0.0
    %888 = vmatpush1.msra.mxu0 0.0
    %889 = vmatprep.subr.mxu0 0.0
    %890 = vmatpush1.msra.mxu0 0.0
    %891 = vmatprep.subr.mxu0 0.0
    %892 = vmatpush1.msra.mxu0 0.0
    %893 = vmatprep.subr.mxu0 0.0
    %894 = vmatpush1.msra.mxu0 0.0
    %895 = vmatprep.subr.mxu0 0.0
    %896 = vmatpush1.msra.mxu0 0.0
    %897 = vmatprep.mubr.f32.mxu0 0.0
    %898 = vmatmul.mubr.f32.gmra.mrb[0].mxu0 %v831
    %v899 = vpop.f32.mrb[0].mxu0
    %v900 = vadd.f32 0.0, %v899
    %v901 = vpop.f32.mrb[0].mxu0
    %902 = vdwg.mxu0
    %905 = vrot.lane.b32.xlu0 %v824, 8
    %v906 = vpop.permute.xlu0 %905
    %907 = vrot.lane.b32.xlu0 %v900, 8
    %v908 = vpop.permute.xlu0 %907
    %vm911 = vcmask 130112
    %912 = vst.msk [vmem:[#allocation2] sm:$0xff] %vm911, %v906
    %913 = vst.msk [vmem:[#allocation2 + $0x8] sm:$0xff] %vm911, %v908
    %914 = vrot.lane.b32.xlu0 %v238, 112
    %v915 = vpop.permute.xlu0 %914
    %916 = vrot.lane.b32.xlu0 %v230, 80
    %v917 = vpop.permute.xlu0 %916
    %v918 = vsel %vm243, %v915, 0
    %v920 = vsel %vm243, %v917, 0
    %922 = vmatprep.subr.mxu0 0.0
    %923 = vmatpush1.xpose.msra.mxu0 %v920
    %924 = vmatprep.subr.mxu0 0.0
    %925 = vmatpush1.xpose.msra.mxu0 0.0
    %926 = vmatprep.subr.mxu0 0.0
    %927 = vmatpush1.xpose.msra.mxu0 0.0
    %928 = vmatprep.subr.mxu0 0.0
    %929 = vmatpush1.xpose.msra.mxu0 0.0
    %930 = vmatprep.subr.mxu0 0.0
    %931 = vmatpush1.xpose.msra.mxu0 0.0
    %932 = vmatprep.subr.mxu0 0.0
    %933 = vmatpush1.xpose.msra.mxu0 0.0
    %934 = vmatprep.subr.mxu0 0.0
    %935 = vmatpush1.xpose.msra.mxu0 0.0
    %936 = vmatprep.subr.mxu0 0.0
    %937 = vmatpush1.xpose.msra.mxu0 0.0
    %938 = vmatprep.subr.mxu0 0.0
    %939 = vmatpush1.xpose.msra.mxu0 0.0
    %940 = vmatprep.subr.mxu0 0.0
    %941 = vmatpush1.xpose.msra.mxu0 0.0
    %942 = vmatprep.subr.mxu0 0.0
    %943 = vmatpush1.xpose.msra.mxu0 0.0
    %944 = vmatprep.subr.mxu0 0.0
    %945 = vmatpush1.xpose.msra.mxu0 0.0
    %946 = vmatprep.subr.mxu0 0.0
    %947 = vmatpush1.xpose.msra.mxu0 0.0
    %948 = vmatprep.subr.mxu0 0.0
    %949 = vmatpush1.xpose.msra.mxu0 0.0
    %950 = vmatprep.subr.mxu0 0.0
    %951 = vmatpush1.xpose.msra.mxu0 0.0
    %952 = vmatprep.subr.mxu0 0.0
    %953 = vmatpush1.xpose.msra.mxu0 0.0
    %954 = vmatprep.subr.mxu0 0.0
    %955 = vmatpush1.xpose.msra.mxu0 0.0
    %956 = vmatprep.subr.mxu0 0.0
    %957 = vmatpush1.xpose.msra.mxu0 0.0
    %958 = vmatprep.subr.mxu0 0.0
    %959 = vmatpush1.xpose.msra.mxu0 0.0
    %960 = vmatprep.subr.mxu0 0.0
    %961 = vmatpush1.xpose.msra.mxu0 0.0
    %962 = vmatprep.subr.mxu0 0.0
    %963 = vmatpush1.xpose.msra.mxu0 0.0
    %964 = vmatprep.subr.mxu0 0.0
    %965 = vmatpush1.xpose.msra.mxu0 0.0
    %966 = vmatprep.subr.mxu0 0.0
    %967 = vmatpush1.xpose.msra.mxu0 0.0
    %968 = vmatprep.subr.mxu0 0.0
    %969 = vmatpush1.xpose.msra.mxu0 0.0
    %970 = vmatprep.subr.mxu0 0.0
    %971 = vmatpush1.xpose.msra.mxu0 0.0
    %972 = vmatprep.subr.mxu0 0.0
    %973 = vmatpush1.xpose.msra.mxu0 0.0
    %974 = vmatprep.subr.mxu0 0.0
    %975 = vmatpush1.xpose.msra.mxu0 0.0
    %976 = vmatprep.subr.mxu0 0.0
    %977 = vmatpush1.xpose.msra.mxu0 0.0
    %978 = vmatprep.subr.mxu0 0.0
    %979 = vmatpush1.xpose.msra.mxu0 0.0
    %980 = vmatprep.subr.mxu0 0.0
    %981 = vmatpush1.xpose.msra.mxu0 0.0
    %982 = vmatprep.subr.mxu0 0.0
    %983 = vmatpush1.xpose.msra.mxu0 0.0
    %984 = vmatprep.subr.mxu0 0.0
    %985 = vmatpush1.xpose.msra.mxu0 0.0
    %986 = vmatprep.mubr.f32.mxu0 0.0
    %987 = vmatmul.mubr.f32.gmra.mrb[0].mxu0 %v918
    %v988 = vpop.f32.mrb[0].mxu0
    %v989 = vadd.f32 0.0, %v988
    %v990 = vpop.f32.mrb[0].mxu0
    %991 = vdwg.mxu0
    %992 = vrot.lane.b32.xlu0 %v239, 112
    %v993 = vpop.permute.xlu0 %992
    %994 = vrot.lane.b32.xlu0 %v235, 80
    %v995 = vpop.permute.xlu0 %994
    %v996 = vsel %vm243, %v993, 0
    %v998 = vsel %vm243, %v995, 0
    %1000 = vmatprep.subr.mxu0 0.0
    %1001 = vmatpush1.xpose.msra.mxu0 %v998
    %1002 = vmatprep.subr.mxu0 0.0
    %1003 = vmatpush1.xpose.msra.mxu0 0.0
    %1004 = vmatprep.subr.mxu0 0.0
    %1005 = vmatpush1.xpose.msra.mxu0 0.0
    %1006 = vmatprep.subr.mxu0 0.0
    %1007 = vmatpush1.xpose.msra.mxu0 0.0
    %1008 = vmatprep.subr.mxu0 0.0
    %1009 = vmatpush1.xpose.msra.mxu0 0.0
    %1010 = vmatprep.subr.mxu0 0.0
    %1011 = vmatpush1.xpose.msra.mxu0 0.0
    %1012 = vmatprep.subr.mxu0 0.0
    %1013 = vmatpush1.xpose.msra.mxu0 0.0
    %1014 = vmatprep.subr.mxu0 0.0
    %1015 = vmatpush1.xpose.msra.mxu0 0.0
    %1016 = vmatprep.subr.mxu0 0.0
    %1017 = vmatpush1.xpose.msra.mxu0 0.0
    %1018 = vmatprep.subr.mxu0 0.0
    %1019 = vmatpush1.xpose.msra.mxu0 0.0
    %1020 = vmatprep.subr.mxu0 0.0
    %1021 = vmatpush1.xpose.msra.mxu0 0.0
    %1022 = vmatprep.subr.mxu0 0.0
    %1023 = vmatpush1.xpose.msra.mxu0 0.0
    %1024 = vmatprep.subr.mxu0 0.0
    %1025 = vmatpush1.xpose.msra.mxu0 0.0
    %1026 = vmatprep.subr.mxu0 0.0
    %1027 = vmatpush1.xpose.msra.mxu0 0.0
    %1028 = vmatprep.subr.mxu0 0.0
    %1029 = vmatpush1.xpose.msra.mxu0 0.0
    %1030 = vmatprep.subr.mxu0 0.0
    %1031 = vmatpush1.xpose.msra.mxu0 0.0
    %1032 = vmatprep.subr.mxu0 0.0
    %1033 = vmatpush1.xpose.msra.mxu0 0.0
    %1034 = vmatprep.subr.mxu0 0.0
    %1035 = vmatpush1.xpose.msra.mxu0 0.0
    %1036 = vmatprep.subr.mxu0 0.0
    %1037 = vmatpush1.xpose.msra.mxu0 0.0
    %1038 = vmatprep.subr.mxu0 0.0
    %1039 = vmatpush1.xpose.msra.mxu0 0.0
    %1040 = vmatprep.subr.mxu0 0.0
    %1041 = vmatpush1.xpose.msra.mxu0 0.0
    %1042 = vmatprep.subr.mxu0 0.0
    %1043 = vmatpush1.xpose.msra.mxu0 0.0
    %1044 = vmatprep.subr.mxu0 0.0
    %1045 = vmatpush1.xpose.msra.mxu0 0.0
    %1046 = vmatprep.subr.mxu0 0.0
    %1047 = vmatpush1.xpose.msra.mxu0 0.0
    %1048 = vmatprep.subr.mxu0 0.0
    %1049 = vmatpush1.xpose.msra.mxu0 0.0
    %1050 = vmatprep.subr.mxu0 0.0
    %1051 = vmatpush1.xpose.msra.mxu0 0.0
    %1052 = vmatprep.subr.mxu0 0.0
    %1053 = vmatpush1.xpose.msra.mxu0 0.0
    %1054 = vmatprep.subr.mxu0 0.0
    %1055 = vmatpush1.xpose.msra.mxu0 0.0
    %1056 = vmatprep.subr.mxu0 0.0
    %1057 = vmatpush1.xpose.msra.mxu0 0.0
    %1058 = vmatprep.subr.mxu0 0.0
    %1059 = vmatpush1.xpose.msra.mxu0 0.0
    %1060 = vmatprep.subr.mxu0 0.0
    %1061 = vmatpush1.xpose.msra.mxu0 0.0
    %1062 = vmatprep.subr.mxu0 0.0
    %1063 = vmatpush1.xpose.msra.mxu0 0.0
    %1064 = vmatprep.mubr.f32.mxu0 0.0
    %1065 = vmatmul.mubr.f32.gmra.mrb[0].mxu0 %v996
    %v1066 = vpop.f32.mrb[0].mxu0
    %v1067 = vadd.f32 0.0, %v1066
    %v1068 = vpop.f32.mrb[0].mxu0
    %1069 = vdwg.mxu0
    %v1070 = vsel %vm243, %v989, -inf
    %1071 = vmax.xlane.f32.xlu0 %v1070
    %v1072 = vpop.xlane.xlu0 %1071
    %v1073 = vsel %vm243, %v1067, -inf
    %1074 = vmax.xlane.f32.xlu0 %v1073
    %v1075 = vpop.xlane.xlu0 %1074
    %v1076 = vsub.f32 %v989, %v1072
    %v1077 = vsub.f32 %v1067, %v1075
    %v1078 = vmul.f32 %v1076, 1.442695
    %v1079 = vpow.pop %v1078
    %v1080 = vmul.f32 %v1077, 1.442695
    %v1081 = vpow.pop %v1080
    %v1082 = vsel %vm243, %v1079, 0.0
    %1083 = vadd.xlane.f32.xlu0 %v1082
    %v1084 = vpop.xlane.xlu0 %1083
    %v1085 = vsel %vm243, %v1081, 0.0
    %1086 = vadd.xlane.f32.xlu0 %v1085
    %v1087 = vpop.xlane.xlu0 %1086
    %v1088 = vrcp.pop %v1084
    %v1089 = vrcp.pop %v1087
    %v1090 = vmul.f32 %v1079, %v1088
    %v1091 = vmul.f32 %v1081, %v1089
    %1092 = vrot.lane.b32.xlu0 %v230, 48
    %v1093 = vpop.permute.xlu0 %1092
    %v1096 = vsel %vm243, %v1090, 0
    %1098 = vmatprep.subr.mxu0 0.0
    %1099 = vmatpush1.msra.mxu0 %v1093
    %1100 = vmatprep.subr.mxu0 0.0
    %1101 = vmatpush1.msra.mxu0 0.0
    %1102 = vmatprep.subr.mxu0 0.0
    %1103 = vmatpush1.msra.mxu0 0.0
    %1104 = vmatprep.subr.mxu0 0.0
    %1105 = vmatpush1.msra.mxu0 0.0
    %1106 = vmatprep.subr.mxu0 0.0
    %1107 = vmatpush1.msra.mxu0 0.0
    %1108 = vmatprep.subr.mxu0 0.0
    %1109 = vmatpush1.msra.mxu0 0.0
    %1110 = vmatprep.subr.mxu0 0.0
    %1111 = vmatpush1.msra.mxu0 0.0
    %1112 = vmatprep.subr.mxu0 0.0
    %1113 = vmatpush1.msra.mxu0 0.0
    %1114 = vmatprep.subr.mxu0 0.0
    %1115 = vmatpush1.msra.mxu0 0.0
    %1116 = vmatprep.subr.mxu0 0.0
    %1117 = vmatpush1.msra.mxu0 0.0
    %1118 = vmatprep.subr.mxu0 0.0
    %1119 = vmatpush1.msra.mxu0 0.0
    %1120 = vmatprep.subr.mxu0 0.0
    %1121 = vmatpush1.msra.mxu0 0.0
    %1122 = vmatprep.subr.mxu0 0.0
    %1123 = vmatpush1.msra.mxu0 0.0
    %1124 = vmatprep.subr.mxu0 0.0
    %1125 = vmatpush1.msra.mxu0 0.0
    %1126 = vmatprep.subr.mxu0 0.0
    %1127 = vmatpush1.msra.mxu0 0.0
    %1128 = vmatprep.subr.mxu0 0.0
    %1129 = vmatpush1.msra.mxu0 0.0
    %1130 = vmatprep.subr.mxu0 0.0
    %1131 = vmatpush1.msra.mxu0 0.0
    %1132 = vmatprep.subr.mxu0 0.0
    %1133 = vmatpush1.msra.mxu0 0.0
    %1134 = vmatprep.subr.mxu0 0.0
    %1135 = vmatpush1.msra.mxu0 0.0
    %1136 = vmatprep.subr.mxu0 0.0
    %1137 = vmatpush1.msra.mxu0 0.0
    %1138 = vmatprep.subr.mxu0 0.0
    %1139 = vmatpush1.msra.mxu0 0.0
    %1140 = vmatprep.subr.mxu0 0.0
    %1141 = vmatpush1.msra.mxu0 0.0
    %1142 = vmatprep.subr.mxu0 0.0
    %1143 = vmatpush1.msra.mxu0 0.0
    %1144 = vmatprep.subr.mxu0 0.0
    %1145 = vmatpush1.msra.mxu0 0.0
    %1146 = vmatprep.subr.mxu0 0.0
    %1147 = vmatpush1.msra.mxu0 0.0
    %1148 = vmatprep.subr.mxu0 0.0
    %1149 = vmatpush1.msra.mxu0 0.0
    %1150 = vmatprep.subr.mxu0 0.0
    %1151 = vmatpush1.msra.mxu0 0.0
    %1152 = vmatprep.subr.mxu0 0.0
    %1153 = vmatpush1.msra.mxu0 0.0
    %1154 = vmatprep.subr.mxu0 0.0
    %1155 = vmatpush1.msra.mxu0 0.0
    %1156 = vmatprep.subr.mxu0 0.0
    %1157 = vmatpush1.msra.mxu0 0.0
    %1158 = vmatprep.subr.mxu0 0.0
    %1159 = vmatpush1.msra.mxu0 0.0
    %1160 = vmatprep.subr.mxu0 0.0
    %1161 = vmatpush1.msra.mxu0 0.0
    %1162 = vmatprep.mubr.f32.mxu0 0.0
    %1163 = vmatmul.mubr.f32.gmra.mrb[0].mxu0 %v1096
    %v1164 = vpop.f32.mrb[0].mxu0
    %v1165 = vadd.f32 0.0, %v1164
    %v1166 = vpop.f32.mrb[0].mxu0
    %1167 = vdwg.mxu0
    %1168 = vrot.lane.b32.xlu0 %v235, 48
    %v1169 = vpop.permute.xlu0 %1168
    %v1172 = vsel %vm243, %v1091, 0
    %1174 = vmatprep.subr.mxu0 0.0
    %1175 = vmatpush1.msra.mxu0 %v1169
    %1176 = vmatprep.subr.mxu0 0.0
    %1177 = vmatpush1.msra.mxu0 0.0
    %1178 = vmatprep.subr.mxu0 0.0
    %1179 = vmatpush1.msra.mxu0 0.0
    %1180 = vmatprep.subr.mxu0 0.0
    %1181 = vmatpush1.msra.mxu0 0.0
    %1182 = vmatprep.subr.mxu0 0.0
    %1183 = vmatpush1.msra.mxu0 0.0
    %1184 = vmatprep.subr.mxu0 0.0
    %1185 = vmatpush1.msra.mxu0 0.0
    %1186 = vmatprep.subr.mxu0 0.0
    %1187 = vmatpush1.msra.mxu0 0.0
    %1188 = vmatprep.subr.mxu0 0.0
    %1189 = vmatpush1.msra.mxu0 0.0
    %1190 = vmatprep.subr.mxu0 0.0
    %1191 = vmatpush1.msra.mxu0 0.0
    %1192 = vmatprep.subr.mxu0 0.0
    %1193 = vmatpush1.msra.mxu0 0.0
    %1194 = vmatprep.subr.mxu0 0.0
    %1195 = vmatpush1.msra.mxu0 0.0
    %1196 = vmatprep.subr.mxu0 0.0
    %1197 = vmatpush1.msra.mxu0 0.0
    %1198 = vmatprep.subr.mxu0 0.0
    %1199 = vmatpush1.msra.mxu0 0.0
    %1200 = vmatprep.subr.mxu0 0.0
    %1201 = vmatpush1.msra.mxu0 0.0
    %1202 = vmatprep.subr.mxu0 0.0
    %1203 = vmatpush1.msra.mxu0 0.0
    %1204 = vmatprep.subr.mxu0 0.0
    %1205 = vmatpush1.msra.mxu0 0.0
    %1206 = vmatprep.subr.mxu0 0.0
    %1207 = vmatpush1.msra.mxu0 0.0
    %1208 = vmatprep.subr.mxu0 0.0
    %1209 = vmatpush1.msra.mxu0 0.0
    %1210 = vmatprep.subr.mxu0 0.0
    %1211 = vmatpush1.msra.mxu0 0.0
    %1212 = vmatprep.subr.mxu0 0.0
    %1213 = vmatpush1.msra.mxu0 0.0
    %1214 = vmatprep.subr.mxu0 0.0
    %1215 = vmatpush1.msra.mxu0 0.0
    %1216 = vmatprep.subr.mxu0 0.0
    %1217 = vmatpush1.msra.mxu0 0.0
    %1218 = vmatprep.subr.mxu0 0.0
    %1219 = vmatpush1.msra.mxu0 0.0
    %1220 = vmatprep.subr.mxu0 0.0
    %1221 = vmatpush1.msra.mxu0 0.0
    %1222 = vmatprep.subr.mxu0 0.0
    %1223 = vmatpush1.msra.mxu0 0.0
    %1224 = vmatprep.subr.mxu0 0.0
    %1225 = vmatpush1.msra.mxu0 0.0
    %1226 = vmatprep.subr.mxu0 0.0
    %1227 = vmatpush1.msra.mxu0 0.0
    %1228 = vmatprep.subr.mxu0 0.0
    %1229 = vmatpush1.msra.mxu0 0.0
    %1230 = vmatprep.subr.mxu0 0.0
    %1231 = vmatpush1.msra.mxu0 0.0
    %1232 = vmatprep.subr.mxu0 0.0
    %1233 = vmatpush1.msra.mxu0 0.0
    %1234 = vmatprep.subr.mxu0 0.0
    %1235 = vmatpush1.msra.mxu0 0.0
    %1236 = vmatprep.subr.mxu0 0.0
    %1237 = vmatpush1.msra.mxu0 0.0
    %1238 = vmatprep.mubr.f32.mxu0 0.0
    %1239 = vmatmul.mubr.f32.gmra.mrb[0].mxu0 %v1172
    %v1240 = vpop.f32.mrb[0].mxu0
    %v1241 = vadd.f32 0.0, %v1240
    %v1242 = vpop.f32.mrb[0].mxu0
    %1243 = vdwg.mxu0
    %1246 = vrot.lane.b32.xlu0 %v1165, 16
    %v1247 = vpop.permute.xlu0 %1246
    %1248 = vrot.lane.b32.xlu0 %v1241, 16
    %v1249 = vpop.permute.xlu0 %1248
    %vm1252 = vcmask 195712
    %1253 = vst.msk [vmem:[#allocation2] sm:$0xff] %vm1252, %v1247
    %1254 = vst.msk [vmem:[#allocation2 + $0x8] sm:$0xff] %vm1252, %v1249
    %1255 = vrot.lane.b32.xlu0 %v238, 104
    %v1256 = vpop.permute.xlu0 %1255
    %1257 = vrot.lane.b32.xlu0 %v230, 72
    %v1258 = vpop.permute.xlu0 %1257
    %v1259 = vsel %vm243, %v1256, 0
    %v1261 = vsel %vm243, %v1258, 0
    %1263 = vmatprep.subr.mxu0 0.0
    %1264 = vmatpush1.xpose.msra.mxu0 %v1261
    %1265 = vmatprep.subr.mxu0 0.0
    %1266 = vmatpush1.xpose.msra.mxu0 0.0
    %1267 = vmatprep.subr.mxu0 0.0
    %1268 = vmatpush1.xpose.msra.mxu0 0.0
    %1269 = vmatprep.subr.mxu0 0.0
    %1270 = vmatpush1.xpose.msra.mxu0 0.0
    %1271 = vmatprep.subr.mxu0 0.0
    %1272 = vmatpush1.xpose.msra.mxu0 0.0
    %1273 = vmatprep.subr.mxu0 0.0
    %1274 = vmatpush1.xpose.msra.mxu0 0.0
    %1275 = vmatprep.subr.mxu0 0.0
    %1276 = vmatpush1.xpose.msra.mxu0 0.0
    %1277 = vmatprep.subr.mxu0 0.0
    %1278 = vmatpush1.xpose.msra.mxu0 0.0
    %1279 = vmatprep.subr.mxu0 0.0
    %1280 = vmatpush1.xpose.msra.mxu0 0.0
    %1281 = vmatprep.subr.mxu0 0.0
    %1282 = vmatpush1.xpose.msra.mxu0 0.0
    %1283 = vmatprep.subr.mxu0 0.0
    %1284 = vmatpush1.xpose.msra.mxu0 0.0
    %1285 = vmatprep.subr.mxu0 0.0
    %1286 = vmatpush1.xpose.msra.mxu0 0.0
    %1287 = vmatprep.subr.mxu0 0.0
    %1288 = vmatpush1.xpose.msra.mxu0 0.0
    %1289 = vmatprep.subr.mxu0 0.0
    %1290 = vmatpush1.xpose.msra.mxu0 0.0
    %1291 = vmatprep.subr.mxu0 0.0
    %1292 = vmatpush1.xpose.msra.mxu0 0.0
    %1293 = vmatprep.subr.mxu0 0.0
    %1294 = vmatpush1.xpose.msra.mxu0 0.0
    %1295 = vmatprep.subr.mxu0 0.0
    %1296 = vmatpush1.xpose.msra.mxu0 0.0
    %1297 = vmatprep.subr.mxu0 0.0
    %1298 = vmatpush1.xpose.msra.mxu0 0.0
    %1299 = vmatprep.subr.mxu0 0.0
    %1300 = vmatpush1.xpose.msra.mxu0 0.0
    %1301 = vmatprep.subr.mxu0 0.0
    %1302 = vmatpush1.xpose.msra.mxu0 0.0
    %1303 = vmatprep.subr.mxu0 0.0
    %1304 = vmatpush1.xpose.msra.mxu0 0.0
    %1305 = vmatprep.subr.mxu0 0.0
    %1306 = vmatpush1.xpose.msra.mxu0 0.0
    %1307 = vmatprep.subr.mxu0 0.0
    %1308 = vmatpush1.xpose.msra.mxu0 0.0
    %1309 = vmatprep.subr.mxu0 0.0
    %1310 = vmatpush1.xpose.msra.mxu0 0.0
    %1311 = vmatprep.subr.mxu0 0.0
    %1312 = vmatpush1.xpose.msra.mxu0 0.0
    %1313 = vmatprep.subr.mxu0 0.0
    %1314 = vmatpush1.xpose.msra.mxu0 0.0
    %1315 = vmatprep.subr.mxu0 0.0
    %1316 = vmatpush1.xpose.msra.mxu0 0.0
    %1317 = vmatprep.subr.mxu0 0.0
    %1318 = vmatpush1.xpose.msra.mxu0 0.0
    %1319 = vmatprep.subr.mxu0 0.0
    %1320 = vmatpush1.xpose.msra.mxu0 0.0
    %1321 = vmatprep.subr.mxu0 0.0
    %1322 = vmatpush1.xpose.msra.mxu0 0.0
    %1323 = vmatprep.subr.mxu0 0.0
    %1324 = vmatpush1.xpose.msra.mxu0 0.0
    %1325 = vmatprep.subr.mxu0 0.0
    %1326 = vmatpush1.xpose.msra.mxu0 0.0
    %1327 = vmatprep.mubr.f32.mxu0 0.0
    %1328 = vmatmul.mubr.f32.gmra.mrb[0].mxu0 %v1259
    %v1329 = vpop.f32.mrb[0].mxu0
    %v1330 = vadd.f32 0.0, %v1329
    %v1331 = vpop.f32.mrb[0].mxu0
    %1332 = vdwg.mxu0
    %1333 = vrot.lane.b32.xlu0 %v239, 104
    %v1334 = vpop.permute.xlu0 %1333
    %1335 = vrot.lane.b32.xlu0 %v235, 72
    %v1336 = vpop.permute.xlu0 %1335
    %v1337 = vsel %vm243, %v1334, 0
    %v1339 = vsel %vm243, %v1336, 0
    %1341 = vmatprep.subr.mxu0 0.0
    %1342 = vmatpush1.xpose.msra.mxu0 %v1339
    %1343 = vmatprep.subr.mxu0 0.0
    %1344 = vmatpush1.xpose.msra.mxu0 0.0
    %1345 = vmatprep.subr.mxu0 0.0
    %1346 = vmatpush1.xpose.msra.mxu0 0.0
    %1347 = vmatprep.subr.mxu0 0.0
    %1348 = vmatpush1.xpose.msra.mxu0 0.0
    %1349 = vmatprep.subr.mxu0 0.0
    %1350 = vmatpush1.xpose.msra.mxu0 0.0
    %1351 = vmatprep.subr.mxu0 0.0
    %1352 = vmatpush1.xpose.msra.mxu0 0.0
    %1353 = vmatprep.subr.mxu0 0.0
    %1354 = vmatpush1.xpose.msra.mxu0 0.0
    %1355 = vmatprep.subr.mxu0 0.0
    %1356 = vmatpush1.xpose.msra.mxu0 0.0
    %1357 = vmatprep.subr.mxu0 0.0
    %1358 = vmatpush1.xpose.msra.mxu0 0.0
    %1359 = vmatprep.subr.mxu0 0.0
    %1360 = vmatpush1.xpose.msra.mxu0 0.0
    %1361 = vmatprep.subr.mxu0 0.0
    %1362 = vmatpush1.xpose.msra.mxu0 0.0
    %1363 = vmatprep.subr.mxu0 0.0
    %1364 = vmatpush1.xpose.msra.mxu0 0.0
    %1365 = vmatprep.subr.mxu0 0.0
    %1366 = vmatpush1.xpose.msra.mxu0 0.0
    %1367 = vmatprep.subr.mxu0 0.0
    %1368 = vmatpush1.xpose.msra.mxu0 0.0
    %1369 = vmatprep.subr.mxu0 0.0
    %1370 = vmatpush1.xpose.msra.mxu0 0.0
    %1371 = vmatprep.subr.mxu0 0.0
    %1372 = vmatpush1.xpose.msra.mxu0 0.0
    %1373 = vmatprep.subr.mxu0 0.0
    %1374 = vmatpush1.xpose.msra.mxu0 0.0
    %1375 = vmatprep.subr.mxu0 0.0
    %1376 = vmatpush1.xpose.msra.mxu0 0.0
    %1377 = vmatprep.subr.mxu0 0.0
    %1378 = vmatpush1.xpose.msra.mxu0 0.0
    %1379 = vmatprep.subr.mxu0 0.0
    %1380 = vmatpush1.xpose.msra.mxu0 0.0
    %1381 = vmatprep.subr.mxu0 0.0
    %1382 = vmatpush1.xpose.msra.mxu0 0.0
    %1383 = vmatprep.subr.mxu0 0.0
    %1384 = vmatpush1.xpose.msra.mxu0 0.0
    %1385 = vmatprep.subr.mxu0 0.0
    %1386 = vmatpush1.xpose.msra.mxu0 0.0
    %1387 = vmatprep.subr.mxu0 0.0
    %1388 = vmatpush1.xpose.msra.mxu0 0.0
    %1389 = vmatprep.subr.mxu0 0.0
    %1390 = vmatpush1.xpose.msra.mxu0 0.0
    %1391 = vmatprep.subr.mxu0 0.0
    %1392 = vmatpush1.xpose.msra.mxu0 0.0
    %1393 = vmatprep.subr.mxu0 0.0
    %1394 = vmatpush1.xpose.msra.mxu0 0.0
    %1395 = vmatprep.subr.mxu0 0.0
    %1396 = vmatpush1.xpose.msra.mxu0 0.0
    %1397 = vmatprep.subr.mxu0 0.0
    %1398 = vmatpush1.xpose.msra.mxu0 0.0
    %1399 = vmatprep.subr.mxu0 0.0
    %1400 = vmatpush1.xpose.msra.mxu0 0.0
    %1401 = vmatprep.subr.mxu0 0.0
    %1402 = vmatpush1.xpose.msra.mxu0 0.0
    %1403 = vmatprep.subr.mxu0 0.0
    %1404 = vmatpush1.xpose.msra.mxu0 0.0
    %1405 = vmatprep.mubr.f32.mxu0 0.0
    %1406 = vmatmul.mubr.f32.gmra.mrb[0].mxu0 %v1337
    %v1407 = vpop.f32.mrb[0].mxu0
    %v1408 = vadd.f32 0.0, %v1407
    %v1409 = vpop.f32.mrb[0].mxu0
    %1410 = vdwg.mxu0
    %v1411 = vsel %vm243, %v1330, -inf
    %1412 = vmax.xlane.f32.xlu0 %v1411
    %v1413 = vpop.xlane.xlu0 %1412
    %v1414 = vsel %vm243, %v1408, -inf
    %1415 = vmax.xlane.f32.xlu0 %v1414
    %v1416 = vpop.xlane.xlu0 %1415
    %v1417 = vsub.f32 %v1330, %v1413
    %v1418 = vsub.f32 %v1408, %v1416
    %v1419 = vmul.f32 %v1417, 1.442695
    %v1420 = vpow.pop %v1419
    %v1421 = vmul.f32 %v1418, 1.442695
    %v1422 = vpow.pop %v1421
    %v1423 = vsel %vm243, %v1420, 0.0
    %1424 = vadd.xlane.f32.xlu0 %v1423
    %v1425 = vpop.xlane.xlu0 %1424
    %v1426 = vsel %vm243, %v1422, 0.0
    %1427 = vadd.xlane.f32.xlu0 %v1426
    %v1428 = vpop.xlane.xlu0 %1427
    %v1429 = vrcp.pop %v1425
    %v1430 = vrcp.pop %v1428
    %v1431 = vmul.f32 %v1420, %v1429
    %v1432 = vmul.f32 %v1422, %v1430
    %1433 = vrot.lane.b32.xlu0 %v230, 40
    %v1434 = vpop.permute.xlu0 %1433
    %v1437 = vsel %vm243, %v1431, 0
    %1439 = vmatprep.subr.mxu0 0.0
    %1440 = vmatpush1.msra.mxu0 %v1434
    %1441 = vmatprep.subr.mxu0 0.0
    %1442 = vmatpush1.msra.mxu0 0.0
    %1443 = vmatprep.subr.mxu0 0.0
    %1444 = vmatpush1.msra.mxu0 0.0
    %1445 = vmatprep.subr.mxu0 0.0
    %1446 = vmatpush1.msra.mxu0 0.0
    %1447 = vmatprep.subr.mxu0 0.0
    %1448 = vmatpush1.msra.mxu0 0.0
    %1449 = vmatprep.subr.mxu0 0.0
    %1450 = vmatpush1.msra.mxu0 0.0
    %1451 = vmatprep.subr.mxu0 0.0
    %1452 = vmatpush1.msra.mxu0 0.0
    %1453 = vmatprep.subr.mxu0 0.0
    %1454 = vmatpush1.msra.mxu0 0.0
    %1455 = vmatprep.subr.mxu0 0.0
    %1456 = vmatpush1.msra.mxu0 0.0
    %1457 = vmatprep.subr.mxu0 0.0
    %1458 = vmatpush1.msra.mxu0 0.0
    %1459 = vmatprep.subr.mxu0 0.0
    %1460 = vmatpush1.msra.mxu0 0.0
    %1461 = vmatprep.subr.mxu0 0.0
    %1462 = vmatpush1.msra.mxu0 0.0
    %1463 = vmatprep.subr.mxu0 0.0
    %1464 = vmatpush1.msra.mxu0 0.0
    %1465 = vmatprep.subr.mxu0 0.0
    %1466 = vmatpush1.msra.mxu0 0.0
    %1467 = vmatprep.subr.mxu0 0.0
    %1468 = vmatpush1.msra.mxu0 0.0
    %1469 = vmatprep.subr.mxu0 0.0
    %1470 = vmatpush1.msra.mxu0 0.0
    %1471 = vmatprep.subr.mxu0 0.0
    %1472 = vmatpush1.msra.mxu0 0.0
    %1473 = vmatprep.subr.mxu0 0.0
    %1474 = vmatpush1.msra.mxu0 0.0
    %1475 = vmatprep.subr.mxu0 0.0
    %1476 = vmatpush1.msra.mxu0 0.0
    %1477 = vmatprep.subr.mxu0 0.0
    %1478 = vmatpush1.msra.mxu0 0.0
    %1479 = vmatprep.subr.mxu0 0.0
    %1480 = vmatpush1.msra.mxu0 0.0
    %1481 = vmatprep.subr.mxu0 0.0
    %1482 = vmatpush1.msra.mxu0 0.0
    %1483 = vmatprep.subr.mxu0 0.0
    %1484 = vmatpush1.msra.mxu0 0.0
    %1485 = vmatprep.subr.mxu0 0.0
    %1486 = vmatpush1.msra.mxu0 0.0
    %1487 = vmatprep.subr.mxu0 0.0
    %1488 = vmatpush1.msra.mxu0 0.0
    %1489 = vmatprep.subr.mxu0 0.0
    %1490 = vmatpush1.msra.mxu0 0.0
    %1491 = vmatprep.subr.mxu0 0.0
    %1492 = vmatpush1.msra.mxu0 0.0
    %1493 = vmatprep.subr.mxu0 0.0
    %1494 = vmatpush1.msra.mxu0 0.0
    %1495 = vmatprep.subr.mxu0 0.0
    %1496 = vmatpush1.msra.mxu0 0.0
    %1497 = vmatprep.subr.mxu0 0.0
    %1498 = vmatpush1.msra.mxu0 0.0
    %1499 = vmatprep.subr.mxu0 0.0
    %1500 = vmatpush1.msra.mxu0 0.0
    %1501 = vmatprep.subr.mxu0 0.0
    %1502 = vmatpush1.msra.mxu0 0.0
    %1503 = vmatprep.mubr.f32.mxu0 0.0
    %1504 = vmatmul.mubr.f32.gmra.mrb[0].mxu0 %v1437
    %v1505 = vpop.f32.mrb[0].mxu0
    %v1506 = vadd.f32 0.0, %v1505
    %v1507 = vpop.f32.mrb[0].mxu0
    %1508 = vdwg.mxu0
    %1509 = vrot.lane.b32.xlu0 %v235, 40
    %v1510 = vpop.permute.xlu0 %1509
    %v1513 = vsel %vm243, %v1432, 0
    %1515 = vmatprep.subr.mxu0 0.0
    %1516 = vmatpush1.msra.mxu0 %v1510
    %1517 = vmatprep.subr.mxu0 0.0
    %1518 = vmatpush1.msra.mxu0 0.0
    %1519 = vmatprep.subr.mxu0 0.0
    %1520 = vmatpush1.msra.mxu0 0.0
    %1521 = vmatprep.subr.mxu0 0.0
    %1522 = vmatpush1.msra.mxu0 0.0
    %1523 = vmatprep.subr.mxu0 0.0
    %1524 = vmatpush1.msra.mxu0 0.0
    %1525 = vmatprep.subr.mxu0 0.0
    %1526 = vmatpush1.msra.mxu0 0.0
    %1527 = vmatprep.subr.mxu0 0.0
    %1528 = vmatpush1.msra.mxu0 0.0
    %1529 = vmatprep.subr.mxu0 0.0
    %1530 = vmatpush1.msra.mxu0 0.0
    %1531 = vmatprep.subr.mxu0 0.0
    %1532 = vmatpush1.msra.mxu0 0.0
    %1533 = vmatprep.subr.mxu0 0.0
    %1534 = vmatpush1.msra.mxu0 0.0
    %1535 = vmatprep.subr.mxu0 0.0
    %1536 = vmatpush1.msra.mxu0 0.0
    %1537 = vmatprep.subr.mxu0 0.0
    %1538 = vmatpush1.msra.mxu0 0.0
    %1539 = vmatprep.subr.mxu0 0.0
    %1540 = vmatpush1.msra.mxu0 0.0
    %1541 = vmatprep.subr.mxu0 0.0
    %1542 = vmatpush1.msra.mxu0 0.0
    %1543 = vmatprep.subr.mxu0 0.0
    %1544 = vmatpush1.msra.mxu0 0.0
    %1545 = vmatprep.subr.mxu0 0.0
    %1546 = vmatpush1.msra.mxu0 0.0
    %1547 = vmatprep.subr.mxu0 0.0
    %1548 = vmatpush1.msra.mxu0 0.0
    %1549 = vmatprep.subr.mxu0 0.0
    %1550 = vmatpush1.msra.mxu0 0.0
    %1551 = vmatprep.subr.mxu0 0.0
    %1552 = vmatpush1.msra.mxu0 0.0
    %1553 = vmatprep.subr.mxu0 0.0
    %1554 = vmatpush1.msra.mxu0 0.0
    %1555 = vmatprep.subr.mxu0 0.0
    %1556 = vmatpush1.msra.mxu0 0.0
    %1557 = vmatprep.subr.mxu0 0.0
    %1558 = vmatpush1.msra.mxu0 0.0
    %1559 = vmatprep.subr.mxu0 0.0
    %1560 = vmatpush1.msra.mxu0 0.0
    %1561 = vmatprep.subr.mxu0 0.0
    %1562 = vmatpush1.msra.mxu0 0.0
    %1563 = vmatprep.subr.mxu0 0.0
    %1564 = vmatpush1.msra.mxu0 0.0
    %1565 = vmatprep.subr.mxu0 0.0
    %1566 = vmatpush1.msra.mxu0 0.0
    %1567 = vmatprep.subr.mxu0 0.0
    %1568 = vmatpush1.msra.mxu0 0.0
    %1569 = vmatprep.subr.mxu0 0.0
    %1570 = vmatpush1.msra.mxu0 0.0
    %1571 = vmatprep.subr.mxu0 0.0
    %1572 = vmatpush1.msra.mxu0 0.0
    %1573 = vmatprep.subr.mxu0 0.0
    %1574 = vmatpush1.msra.mxu0 0.0
    %1575 = vmatprep.subr.mxu0 0.0
    %1576 = vmatpush1.msra.mxu0 0.0
    %1577 = vmatprep.subr.mxu0 0.0
    %1578 = vmatpush1.msra.mxu0 0.0
    %1579 = vmatprep.mubr.f32.mxu0 0.0
    %1580 = vmatmul.mubr.f32.gmra.mrb[0].mxu0 %v1513
    %v1581 = vpop.f32.mrb[0].mxu0
    %v1582 = vadd.f32 0.0, %v1581
    %v1583 = vpop.f32.mrb[0].mxu0
    %1584 = vdwg.mxu0
    %1587 = vrot.lane.b32.xlu0 %v1506, 24
    %v1588 = vpop.permute.xlu0 %1587
    %1589 = vrot.lane.b32.xlu0 %v1582, 24
    %v1590 = vpop.permute.xlu0 %1589
    %vm1593 = vcmask 261312
    %1594 = vst.msk [vmem:[#allocation2] sm:$0xff] %vm1593, %v1588
    %1595 = vst.msk [vmem:[#allocation2 + $0x8] sm:$0xff] %vm1593, %v1590
    %v1596 = vld [vmem:[#allocation2] sm:$0xff]
    %v1597 = vld [vmem:[#allocation2 + $0x8] sm:$0xff]
    %v1598 = vld [vmem:[%s3] sm:$0xff]
    %v1599 = vld [vmem:[%s3 + $0x8] sm:$0xff]
    %v1600 = vld [vmem:[%s3 + $0x10] sm:$0xff]
    %v1601 = vld [vmem:[%s3 + $0x18] sm:$0xff]
    %v1602 = vlaneseq
    %v1603 = vshrl.u32 %v1602, 7
    %v1604 = vsub.s32 3, %v1603
    %v1605 = vrot.slane %v50, %v1604
    %v1607 = vsel %vm109, %v1596, 0
    %v1610 = vsel %vm109, %v1597, 0
    %1612 = vmatprep.subr.mxu0 0.0
    %1613 = vmatpush1.msra.mxu0 %v1598
    %1614 = vmatprep.subr.mxu0 0.0
    %1615 = vmatpush1.msra.mxu0 %v1599
    %1616 = vmatprep.subr.mxu0 0.0
    %1617 = vmatpush1.msra.mxu0 %v1600
    %1618 = vmatprep.subr.mxu0 0.0
    %1619 = vmatpush1.msra.mxu0 %v1601
    %1620 = vmatprep.subr.mxu0 0.0
    %1621 = vmatpush1.msra.mxu0 0.0
    %1622 = vmatprep.subr.mxu0 0.0
    %1623 = vmatpush1.msra.mxu0 0.0
    %1624 = vmatprep.subr.mxu0 0.0
    %1625 = vmatpush1.msra.mxu0 0.0
    %1626 = vmatprep.subr.mxu0 0.0
    %1627 = vmatpush1.msra.mxu0 0.0
    %1628 = vmatprep.subr.mxu0 0.0
    %1629 = vmatpush1.msra.mxu0 0.0
    %1630 = vmatprep.subr.mxu0 0.0
    %1631 = vmatpush1.msra.mxu0 0.0
    %1632 = vmatprep.subr.mxu0 0.0
    %1633 = vmatpush1.msra.mxu0 0.0
    %1634 = vmatprep.subr.mxu0 0.0
    %1635 = vmatpush1.msra.mxu0 0.0
    %1636 = vmatprep.subr.mxu0 0.0
    %1637 = vmatpush1.msra.mxu0 0.0
    %1638 = vmatprep.subr.mxu0 0.0
    %1639 = vmatpush1.msra.mxu0 0.0
    %1640 = vmatprep.subr.mxu0 0.0
    %1641 = vmatpush1.msra.mxu0 0.0
    %1642 = vmatprep.subr.mxu0 0.0
    %1643 = vmatpush1.msra.mxu0 0.0
    %1644 = vmatprep.subr.mxu0 0.0
    %1645 = vmatpush1.msra.mxu0 0.0
    %1646 = vmatprep.subr.mxu0 0.0
    %1647 = vmatpush1.msra.mxu0 0.0
    %1648 = vmatprep.subr.mxu0 0.0
    %1649 = vmatpush1.msra.mxu0 0.0
    %1650 = vmatprep.subr.mxu0 0.0
    %1651 = vmatpush1.msra.mxu0 0.0
    %1652 = vmatprep.subr.mxu0 0.0
    %1653 = vmatpush1.msra.mxu0 0.0
    %1654 = vmatprep.subr.mxu0 0.0
    %1655 = vmatpush1.msra.mxu0 0.0
    %1656 = vmatprep.subr.mxu0 0.0
    %1657 = vmatpush1.msra.mxu0 0.0
    %1658 = vmatprep.subr.mxu0 0.0
    %1659 = vmatpush1.msra.mxu0 0.0
    %1660 = vmatprep.subr.mxu0 0.0
    %1661 = vmatpush1.msra.mxu0 0.0
    %1662 = vmatprep.subr.mxu0 0.0
    %1663 = vmatpush1.msra.mxu0 0.0
    %1664 = vmatprep.subr.mxu0 0.0
    %1665 = vmatpush1.msra.mxu0 0.0
    %1666 = vmatprep.subr.mxu0 0.0
    %1667 = vmatpush1.msra.mxu0 0.0
    %1668 = vmatprep.subr.mxu0 0.0
    %1669 = vmatpush1.msra.mxu0 0.0
    %1670 = vmatprep.subr.mxu0 0.0
    %1671 = vmatpush1.msra.mxu0 0.0
    %1672 = vmatprep.subr.mxu0 0.0
    %1673 = vmatpush1.msra.mxu0 0.0
    %1674 = vmatprep.subr.mxu0 0.0
    %1675 = vmatpush1.msra.mxu0 0.0
    %1676 = vmatprep.mubr.f32.mxu0 0.0
    %1677 = vmatmul.mubr.f32.gmra.mrb[0].mxu0 %v1607
    %v1678 = vpop.f32.mrb[0].mxu0
    %v1679 = vadd.f32 %v1605, %v1678
    %v1680 = vpop.f32.mrb[0].mxu0
    %1681 = vmatprep.mubr.f32.mxu0 0.0
    %1682 = vmatmul.mubr.f32.gmra.mrb[0].mxu0 %v1610
    %v1683 = vpop.f32.mrb[0].mxu0
    %v1684 = vadd.f32 %v1605, %v1683
    %v1685 = vpop.f32.mrb[0].mxu0
    %1686 = vdwg.mxu0
    %v1687 = vadd.f32 %v107, %v1679
    %v1688 = vadd.f32 %v108, %v1684
    %v1689 = vsel %vm109, %v1687, 0.0
    %1690 = vadd.xlane.f32.xlu0 %v1689
    %v1691 = vpop.xlane.xlu0 %1690
    %v1692 = vsel %vm109, %v1688, 0.0
    %1693 = vadd.xlane.f32.xlu0 %v1692
    %v1694 = vpop.xlane.xlu0 %1693
    %v1695 = vmul.f32 %v1691, %v116
    %v1696 = vmul.f32 %v1694, %v116
    %v1697 = vsub.f32 %v1687, %v1695
    %v1698 = vsub.f32 %v1688, %v1696
    %v1699 = vmul.f32 %v1697, %v1697
    %v1700 = vmul.f32 %v1698, %v1698
    %v1701 = vsel %vm109, %v1699, 0.0
    %1702 = vadd.xlane.f32.xlu0 %v1701
    %v1703 = vpop.xlane.xlu0 %1702
    %v1704 = vsel %vm109, %v1700, 0.0
    %1705 = vadd.xlane.f32.xlu0 %v1704
    %v1706 = vpop.xlane.xlu0 %1705
    %v1707 = vmul.f32 %v1703, %v116
    %v1708 = vmul.f32 %v1706, %v116
    %v1709 = vadd.f32 %v1707, 1e-05
    %v1710 = vadd.f32 %v1708, 1e-05
    %v1711 = vrsqrt.pop %v1709
    %v1712 = vrsqrt.pop %v1710
    %v1713 = vmul.f32 %v1697, %v1711
    %v1714 = vmul.f32 %v1698, %v1712
    %v1715 = vlaneseq
    %v1716 = vshrl.u32 %v1715, 7
    %v1717 = vsub.s32 4, %v1716
    %v1718 = vrot.slane %v50, %v1717
    %v1719 = vmul.f32 %v1713, %v1718
    %v1720 = vmul.f32 %v1714, %v1718
    %v1721 = vlaneseq
    %v1722 = vshrl.u32 %v1721, 7
    %v1723 = vsub.s32 5, %v1722
    %v1724 = vrot.slane %v50, %v1723
    %v1725 = vadd.f32 %v1719, %v1724
    %v1726 = vadd.f32 %v1720, %v1724
    %v1727 = vld [vmem:[%s4] sm:$0xff]
    %v1728 = vld [vmem:[%s4 + $0x8] sm:$0xff]
    %v1729 = vld [vmem:[%s4 + $0x10] sm:$0xff]
    %v1730 = vld [vmem:[%s4 + $0x18] sm:$0xff]
    %v1731 = vlaneseq
    %v1732 = vshrl.u32 %v1731, 7
    %v1733 = vsub.s32 6, %v1732
    %v1734 = vrot.slane %v50, %v1733
    %v1736 = vsel %vm109, %v1725, 0
    %v1739 = vsel %vm109, %v1726, 0
    %1741 = vmatprep.subr.mxu0 0.0
    %1742 = vmatpush1.msra.mxu0 %v1727
    %1743 = vmatprep.subr.mxu0 0.0
    %1744 = vmatpush1.msra.mxu0 %v1728
    %1745 = vmatprep.subr.mxu0 0.0
    %1746 = vmatpush1.msra.mxu0 %v1729
    %1747 = vmatprep.subr.mxu0 0.0
    %1748 = vmatpush1.msra.mxu0 %v1730
    %1749 = vmatprep.subr.mxu0 0.0
    %1750 = vmatpush1.msra.mxu0 0.0
    %1751 = vmatprep.subr.mxu0 0.0
    %1752 = vmatpush1.msra.mxu0 0.0
    %1753 = vmatprep.subr.mxu0 0.0
    %1754 = vmatpush1.msra.mxu0 0.0
    %1755 = vmatprep.subr.mxu0 0.0
    %1756 = vmatpush1.msra.mxu0 0.0
    %1757 = vmatprep.subr.mxu0 0.0
    %1758 = vmatpush1.msra.mxu0 0.0
    %1759 = vmatprep.subr.mxu0 0.0
    %1760 = vmatpush1.msra.mxu0 0.0
    %1761 = vmatprep.subr.mxu0 0.0
    %1762 = vmatpush1.msra.mxu0 0.0
    %1763 = vmatprep.subr.mxu0 0.0
    %1764 = vmatpush1.msra.mxu0 0.0
    %1765 = vmatprep.subr.mxu0 0.0
    %1766 = vmatpush1.msra.mxu0 0.0
    %1767 = vmatprep.subr.mxu0 0.0
    %1768 = vmatpush1.msra.mxu0 0.0
    %1769 = vmatprep.subr.mxu0 0.0
    %1770 = vmatpush1.msra.mxu0 0.0
    %1771 = vmatprep.subr.mxu0 0.0
    %1772 = vmatpush1.msra.mxu0 0.0
    %1773 = vmatprep.subr.mxu0 0.0
    %1774 = vmatpush1.msra.mxu0 0.0
    %1775 = vmatprep.subr.mxu0 0.0
    %1776 = vmatpush1.msra.mxu0 0.0
    %1777 = vmatprep.subr.mxu0 0.0
    %1778 = vmatpush1.msra.mxu0 0.0
    %1779 = vmatprep.subr.mxu0 0.0
    %1780 = vmatpush1.msra.mxu0 0.0
    %1781 = vmatprep.subr.mxu0 0.0
    %1782 = vmatpush1.msra.mxu0 0.0
    %1783 = vmatprep.subr.mxu0 0.0
    %1784 = vmatpush1.msra.mxu0 0.0
    %1785 = vmatprep.subr.mxu0 0.0
    %1786 = vmatpush1.msra.mxu0 0.0
    %1787 = vmatprep.subr.mxu0 0.0
    %1788 = vmatpush1.msra.mxu0 0.0
    %1789 = vmatprep.subr.mxu0 0.0
    %1790 = vmatpush1.msra.mxu0 0.0
    %1791 = vmatprep.subr.mxu0 0.0
    %1792 = vmatpush1.msra.mxu0 0.0
    %1793 = vmatprep.subr.mxu0 0.0
    %1794 = vmatpush1.msra.mxu0 0.0
    %1795 = vmatprep.subr.mxu0 0.0
    %1796 = vmatpush1.msra.mxu0 0.0
    %1797 = vmatprep.subr.mxu0 0.0
    %1798 = vmatpush1.msra.mxu0 0.0
    %1799 = vmatprep.subr.mxu0 0.0
    %1800 = vmatpush1.msra.mxu0 0.0
    %1801 = vmatprep.subr.mxu0 0.0
    %1802 = vmatpush1.msra.mxu0 0.0
    %1803 = vmatprep.subr.mxu0 0.0
    %1804 = vmatpush1.msra.mxu0 0.0
    %1805 = vmatprep.mubr.f32.mxu0 0.0
    %1806 = vmatmul.mubr.f32.gmra.mrb[0].mxu0 %v1736
    %v1807 = vpop.f32.mrb[0].mxu0
    %v1808 = vadd.f32 %v1734, %v1807
    %v1809 = vpop.f32.mrb[0].mxu0
    %1810 = vmatprep.mubr.f32.mxu0 0.0
    %1811 = vmatmul.mubr.f32.gmra.mrb[0].mxu0 %v1739
    %v1812 = vpop.f32.mrb[0].mxu0
    %v1813 = vadd.f32 %v1734, %v1812
    %v1814 = vpop.f32.mrb[0].mxu0
    %1815 = vdwg.mxu0
    %v1816 = vmax.f32 %v1808, 0.0
    %v1817 = vmax.f32 %v1813, 0.0
    %v1818 = vld [vmem:[%s5] sm:$0xff]
    %v1819 = vld [vmem:[%s5 + $0x8] sm:$0xff]
    %v1820 = vld [vmem:[%s5 + $0x10] sm:$0xff]
    %v1821 = vld [vmem:[%s5 + $0x18] sm:$0xff]
    %v1822 = vld [vmem:[%s5 + $0x20] sm:$0xff]
    %v1823 = vld [vmem:[%s5 + $0x28] sm:$0xff]
    %v1824 = vld [vmem:[%s5 + $0x30] sm:$0xff]
    %v1825 = vld [vmem:[%s5 + $0x38] sm:$0xff]
    %v1826 = vlaneseq
    %v1827 = vshrl.u32 %v1826, 7
    %v1828 = vsub.s32 7, %v1827
    %v1829 = vrot.slane %v50, %v1828
    %vm1830 = vcmask 523264
    %v1832 = vsel %vm1830, %v1816, 0
    %v1835 = vsel %vm1830, %v1817, 0
    %1837 = vmatprep.subr.mxu0 0.0
    %1838 = vmatpush1.msra.mxu0 %v1818
    %1839 = vmatprep.subr.mxu0 0.0
    %1840 = vmatpush1.msra.mxu0 %v1819
    %1841 = vmatprep.subr.mxu0 0.0
    %1842 = vmatpush1.msra.mxu0 %v1820
    %1843 = vmatprep.subr.mxu0 0.0
    %1844 = vmatpush1.msra.mxu0 %v1821
    %1845 = vmatprep.subr.mxu0 0.0
    %1846 = vmatpush1.msra.mxu0 %v1822
    %1847 = vmatprep.subr.mxu0 0.0
    %1848 = vmatpush1.msra.mxu0 %v1823
    %1849 = vmatprep.subr.mxu0 0.0
    %1850 = vmatpush1.msra.mxu0 %v1824
    %1851 = vmatprep.subr.mxu0 0.0
    %1852 = vmatpush1.msra.mxu0 %v1825
    %1853 = vmatprep.subr.mxu0 0.0
    %1854 = vmatpush1.msra.mxu0 0.0
    %1855 = vmatprep.subr.mxu0 0.0
    %1856 = vmatpush1.msra.mxu0 0.0
    %1857 = vmatprep.subr.mxu0 0.0
    %1858 = vmatpush1.msra.mxu0 0.0
    %1859 = vmatprep.subr.mxu0 0.0
    %1860 = vmatpush1.msra.mxu0 0.0
    %1861 = vmatprep.subr.mxu0 0.0
    %1862 = vmatpush1.msra.mxu0 0.0
    %1863 = vmatprep.subr.mxu0 0.0
    %1864 = vmatpush1.msra.mxu0 0.0
    %1865 = vmatprep.subr.mxu0 0.0
    %1866 = vmatpush1.msra.mxu0 0.0
    %1867 = vmatprep.subr.mxu0 0.0
    %1868 = vmatpush1.msra.mxu0 0.0
    %1869 = vmatprep.subr.mxu0 0.0
    %1870 = vmatpush1.msra.mxu0 0.0
    %1871 = vmatprep.subr.mxu0 0.0
    %1872 = vmatpush1.msra.mxu0 0.0
    %1873 = vmatprep.subr.mxu0 0.0
    %1874 = vmatpush1.msra.mxu0 0.0
    %1875 = vmatprep.subr.mxu0 0.0
    %1876 = vmatpush1.msra.mxu0 0.0
    %1877 = vmatprep.subr.mxu0 0.0
    %1878 = vmatpush1.msra.mxu0 0.0
    %1879 = vmatprep.subr.mxu0 0.0
    %1880 = vmatpush1.msra.mxu0 0.0
    %1881 = vmatprep.subr.mxu0 0.0
    %1882 = vmatpush1.msra.mxu0 0.0
    %1883 = vmatprep.subr.mxu0 0.0
    %1884 = vmatpush1.msra.mxu0 0.0
    %1885 = vmatprep.subr.mxu0 0.0
    %1886 = vmatpush1.msra.mxu0 0.0
    %1887 = vmatprep.subr.mxu0 0.0
    %1888 = vmatpush1.msra.mxu0 0.0
    %1889 = vmatprep.subr.mxu0 0.0
    %1890 = vmatpush1.msra.mxu0 0.0
    %1891 = vmatprep.subr.mxu0 0.0
    %1892 = vmatpush1.msra.mxu0 0.0
    %1893 = vmatprep.subr.mxu0 0.0
    %1894 = vmatpush1.msra.mxu0 0.0
    %1895 = vmatprep.subr.mxu0 0.0
    %1896 = vmatpush1.msra.mxu0 0.0
    %1897 = vmatprep.subr.mxu0 0.0
    %1898 = vmatpush1.msra.mxu0 0.0
    %1899 = vmatprep.subr.mxu0 0.0
    %1900 = vmatpush1.msra.mxu0 0.0
    %1901 = vmatprep.mubr.f32.mxu0 0.0
    %1902 = vmatmul.mubr.f32.gmra.mrb[0].mxu0 %v1832
    %v1903 = vpop.f32.mrb[0].mxu0
    %v1904 = vadd.f32 %v1829, %v1903
    %v1905 = vpop.f32.mrb[0].mxu0
    %1906 = vmatprep.mubr.f32.mxu0 0.0
    %1907 = vmatmul.mubr.f32.gmra.mrb[0].mxu0 %v1835
    %v1908 = vpop.f32.mrb[0].mxu0
    %v1909 = vadd.f32 %v1829, %v1908
    %v1910 = vpop.f32.mrb[0].mxu0
    %1911 = vdwg.mxu0
    %v1912 = vadd.f32 %v1687, %v1904
    %v1913 = vadd.f32 %v1688, %v1909
    %v1914 = vcombine.high %v1912, 0.0
    %v1916 = vunpack.c.l.s4 1983009808
    %v1917 = vunpack.c.0.s8 %v1916
    %v1918 = vlaneseq
    %v1919 = vshrl.u32 %v1918, 7
    %v1920 = vsub.s32 %v1917, %v1919
    %v1921 = vrot.slane %v1912, %v1920
    %v1923 = vunpack.c.l.s4 1983009808
    %v1924 = vunpack.c.0.s8 %v1923
    %v1925 = vlaneseq
    %v1926 = vshrl.u32 %v1925, 7
    %v1927 = vsub.s32 %v1924, %v1926
    %v1928 = vrot.slane %v1914, %v1927
    %v1929 = vcombine.high %v1913, 0.0
    %v1931 = vunpack.c.l.s4 1983009808
    %v1932 = vunpack.c.0.s8 %v1931
    %v1933 = vlaneseq
    %v1934 = vshrl.u32 %v1933, 7
    %v1935 = vsub.s32 %v1932, %v1934
    %v1936 = vrot.slane %v1913, %v1935
    %v1938 = vunpack.c.l.s4 1983009808
    %v1939 = vunpack.c.0.s8 %v1938
    %v1940 = vlaneseq
    %v1941 = vshrl.u32 %v1940, 7
    %v1942 = vsub.s32 %v1939, %v1941
    %v1943 = vrot.slane %v1929, %v1942
    %v1944 = vcombine.low %v1921, %v1936
    %v1945 = vcombine.high %v1921, %v1936
    %v1947 = vunpack.c.l.s4 1934713408
    %v1948 = vunpack.c.0.s8 %v1947
    %v1949 = vlaneseq
    %v1950 = vshrl.u32 %v1949, 7
    %v1951 = vsub.s32 %v1948, %v1950
    %v1952 = vrot.slane %v1944, %v1951
    %v1954 = vunpack.c.l.s4 1934713408
    %v1955 = vunpack.c.0.s8 %v1954
    %v1956 = vlaneseq
    %v1957 = vshrl.u32 %v1956, 7
    %v1958 = vsub.s32 %v1955, %v1957
    %v1959 = vrot.slane %v1945, %v1958
    %v1960 = vcombine.low %v1928, %v1943
    %v1961 = vcombine.high %v1928, %v1943
    %v1963 = vunpack.c.l.s4 1934713408
    %v1964 = vunpack.c.0.s8 %v1963
    %v1965 = vlaneseq
    %v1966 = vshrl.u32 %v1965, 7
    %v1967 = vsub.s32 %v1964, %v1966
    %v1968 = vrot.slane %v1960, %v1967
    %v1970 = vunpack.c.l.s4 1934713408
    %v1971 = vunpack.c.0.s8 %v1970
    %v1972 = vlaneseq
    %v1973 = vshrl.u32 %v1972, 7
    %v1974 = vsub.s32 %v1971, %v1973
    %v1975 = vrot.slane %v1961, %v1974
    %v1976 = vcombine.high %v1952, 0.0
    %v1977 = vcombine.high %v1959, 0.0
    %v1978 = vcombine.high %v1968, 0.0
    %v1979 = vcombine.high %v1975, 0.0
    %vm1980 = vcmask 254976
    %1981 = vst.msk [vmem:[#allocation8] sm:$0x3] %vm1980, %v1952
    %1982 = vst.msk [vmem:[#allocation8 + $0x2] sm:$0x3] %vm1980, %v1976
    %1983 = vst.msk [vmem:[#allocation8 + $0x4] sm:$0x3] %vm1980, %v1959
    %1984 = vst.msk [vmem:[#allocation8 + $0x6] sm:$0x3] %vm1980, %v1977
    %1985 = vst.msk [vmem:[#allocation8 + $0x8] sm:$0x3] %vm1980, %v1968
    %1986 = vst.msk [vmem:[#allocation8 + $0xa] sm:$0x3] %vm1980, %v1978
    %1987 = vst.msk [vmem:[#allocation8 + $0xc] sm:$0x3] %vm1980, %v1975
    %1988 = vst.msk [vmem:[#allocation8 + $0xe] sm:$0x3] %vm1980, %v1979
    // Predicated region
    $region34: #{tpu_custom_call.1} parent=1 // pred_check
      _
    $region35: #{tpu_custom_call.1} parent=1 // pred_check_branch
      %1990 = sbr.rel (0) target = $region37
    $region36: #{tpu_custom_call.1} parent=1 // pred_region
      %s1992 = ssub.s32 256, 256
      %1993 = vsyncadd [#allocation5], %s1992
      %s1994 = sshll.u32 [#allocation8], 4
      %s1995 = int_to_ptr.vmem [resolvable:$true] %s1994
      %2000 = dma.vmem_to_hbm [thread:$0]  %s1995, 256, %s6, [#allocation5], 32, 32, 2
    $region37: #{tpu_custom_call.1} parent=1 // pred_fallthru
      _
    // Predicated region
    $region38: #{tpu_custom_call.1} parent=1 // pred_check
      _
    $region39: #{tpu_custom_call.1} parent=1 // pred_check_branch
      %2002 = sbr.rel (0) target = $region41
    $region40: #{tpu_custom_call.1} parent=1 // pred_region
      %2003 = dma.done [#allocation5], 256
    $region41: #{tpu_custom_call.1} parent=1 // pred_fallthru
      _
    %2004 = vsyncpa [#allocation4], 1
    %2005 = vsyncpa [#allocation7], 1
    %2006 = vsyncpa [#allocation5], 1

</llo_original>
